<compile_context>
chip_gen: v6e
topology: v6e:2x2x1
jax: 0.10.0
libtpu: 0.0.40
codegen_flags: <defaults>
</compile_context>

<pallas_src>
import functools

import jax
import jax.numpy as jnp
import numpy as np
from jax import lax
from jax.experimental import pallas as pl
from jax.experimental.pallas import tpu as pltpu


# ----------------------------------------------------------------------------
# Host-side helper: per-sample amnesic weights (same math as the torch module)
# ----------------------------------------------------------------------------
def _amnesic_table(train_iteration, num_steps, amn_params):
    """[w_old, w_new] for samples train_iteration .. train_iteration+T-1."""
    n1, n2, m, c = (float(v) for v in amn_params)
    tbl = np.zeros((num_steps, 2), dtype=np.float32)
    for t in range(num_steps):
        # module: _amnesic(get_current_train_iteration() + 1); _i = n + 1
        n = train_iteration + t + 1
        _i = float(n + 1)
        if _i < n1:
            l = 0.0
        elif _i < n2:
            l = c * (_i - n1) / (n2 - n1)
        else:
            l = c + (_i - n2) / m
        tbl[t, 0] = (_i - 1.0 - l) / _i       # w_old (w1)
        tbl[t, 1] = (1.0 + l) / _i            # w_new (w2)
    return tbl


# ----------------------------------------------------------------------------
# Pallas kernel: one grid step == one sample (sequential CCIPCA update + proj)
# ----------------------------------------------------------------------------
def _ccipca_kernel(w_ref, x_ref, vu_in_ref, d_in_ref,      # inputs
                   y_ref, vu_ref, vn_ref, dh_ref,          # outputs
                   d2_sm, invd_sm,                         # scratch
                   *, output_dim):
    """
    w_ref     : (T, 2)    SMEM   per-step amnesic weights [w1, w2]
    x_ref     : (1, 1, D) VMEM   current sample
    vu_in_ref : (K, D)    VMEM   initial self._v (transposed), DMA'd once
    d_in_ref  : (K,)      SMEM   initial self.d
    y_ref     : (1, K, 1) VMEM   projection of this sample on updated self.v
    vu_ref    : (K, D)    VMEM   self._v state (resident: constant block index)
    vn_ref    : (K, D)    VMEM   self.v state  (resident)
    dh_ref    : (1, K, 1) VMEM   self.d after this step (history; last = final)
    d2_sm     : (K,)      SMEM   running per-component squared norms ||_v_j||^2
    invd_sm   : (K,)      SMEM   running per-component inverse norms 1/||_v_j||
    """
    t = pl.program_id(0)

    @pl.when(t == 0)
    def _init():
        vu_ref[...] = vu_in_ref[...]
        for j in range(output_dim):
            dj = d_in_ref[j]
            d2_sm[j] = dj * dj
            invd_sm[j] = 1.0 / dj

    w1 = w_ref[t, 0]
    w2 = w_ref[t, 1]
    w1sq = w1 * w1            # loop-invariant, hoisted
    w1x2 = 2.0 * w1           # loop-invariant, hoisted

    x = x_ref[0]                          # (1, D)
    r = x
    rr = jnp.sum(x * x)                   # ||r||^2 (off the serial chain)

    # Fully unrolled sequential component update — one cross-lane reduction
    # per component; no scalar sqrt/divide on the serial dependency chain.
    for j in range(output_dim):
        v_old = vu_ref[pl.ds(j, 1), :]                        # (1, D)
        d2_old = d2_sm[j]                                     # ||v_old||^2
        invd_old = invd_sm[j]                                 # 1/||v_old||
        s = jnp.sum(r * v_old)                                # r . v_old
        c = w2 * s * invd_old
        vu_new = w1 * v_old + c * r                           # updated _v[:, j]
        d2_new = w1sq * d2_old + w1x2 * c * s + c * c * rr    # ||vu_new||^2
        inv_d = lax.rsqrt(d2_new)                             # 1/||vu_new|| (EUP)
        p = (w1 * s + c * rr) * inv_d                         # r . vn
        vu_ref[pl.ds(j, 1), :] = vu_new
        vn_ref[pl.ds(j, 1), :] = vu_new * inv_d               # self.v[:, j]
        d2_sm[j] = d2_new
        invd_sm[j] = inv_d
        r = r - (p * inv_d) * vu_new                          # deflate residual
        rr = rr - p * p                                       # ||r||^2 update

    # Tiny vectorized epilogue: one (K, D) reduce for d, one for y (XLU only).
    vu_all = vu_ref[...]                                      # (K, D)
    nrm2 = jnp.sum(vu_all * vu_all, axis=1, keepdims=True)    # (K, 1)
    dh_ref[...] = jnp.sqrt(nrm2).reshape(1, output_dim, 1)    # self.d
    yk = jnp.sum(x * vn_ref[...], axis=1, keepdims=True)      # (K, 1) = (x @ v)^T
    y_ref[...] = yk.reshape(1, output_dim, 1)


# ----------------------------------------------------------------------------
# Wrapper: state handling + module bookkeeping (var_tot / reduced dims)
# ----------------------------------------------------------------------------
def online_pca_forward(x, v_unnorm, d, *, train_iteration=0,
                       amn_params=(20, 200, 2000, 3), var_tot=1.0, var_rel=1.0):
    """
    x         : (T, D) float32   T sequential samples (== T forward() calls)
    v_unnorm  : (K, D) float32   self._v (transposed layout)
    d         : (K,)   float32   self.d
    Returns (y of shape (T, K), new_state dict).
    """
    T, D = x.shape
    K, D2 = v_unnorm.shape
    assert D == D2

    w_tbl = jnp.asarray(_amnesic_table(train_iteration, T, amn_params))
    x3 = x.reshape(T, 1, D)

    kernel = functools.partial(_ccipca_kernel, output_dim=K)

    flops = int(T * 12 * K * D)
    transcendentals = int(T * 2 * K)
    bytes_accessed = int(4 * (T * D + 2 * T * K + 2 * K * D + K + 2 * T))

    y3, vu_new, vn_new, dh = pl.pallas_call(
        kernel,
        out_shape=(
            jax.ShapeDtypeStruct((T, K, 1), jnp.float32),     # y (per step)
            jax.ShapeDtypeStruct((K, D), jnp.float32),        # self._v
            jax.ShapeDtypeStruct((K, D), jnp.float32),        # self.v
            jax.ShapeDtypeStruct((T, K, 1), jnp.float32),     # self.d history
        ),
        grid=(T,),
        in_specs=[
            pl.BlockSpec(memory_space=pltpu.MemorySpace.SMEM),     # amnesic table
            pl.BlockSpec((1, 1, D), lambda t: (t, 0, 0)),          # x sample t
            pl.BlockSpec((K, D), lambda t: (0, 0)),                # _v init (once)
            pl.BlockSpec(memory_space=pltpu.MemorySpace.SMEM),     # d init
        ],
        out_specs=(
            pl.BlockSpec((1, K, 1), lambda t: (t, 0, 0)),          # y
            pl.BlockSpec((K, D), lambda t: (0, 0)),                # _v (resident)
            pl.BlockSpec((K, D), lambda t: (0, 0)),                # v  (resident)
            pl.BlockSpec((1, K, 1), lambda t: (t, 0, 0)),          # d history
        ),
        scratch_shapes=[pltpu.SMEM((K,), jnp.float32),             # ||_v_j||^2
                        pltpu.SMEM((K,), jnp.float32)],            # 1/||_v_j||
        compiler_params=pltpu.CompilerParams(
            dimension_semantics=("arbitrary",)),
        cost_estimate=pl.CostEstimate(flops=flops,
                                      transcendentals=transcendentals,
                                      bytes_accessed=bytes_accessed),
    )(w_tbl, x3, v_unnorm, d)

    y = y3[:, :, 0]                       # (T, K)
    d_hist = dh[:, :, 0]                  # (T, K)
    d_new = d_hist[-1]

    # Module bookkeeping (explained variance / reducible dimensionality).
    ev_per_step = jnp.sum(d_hist, axis=1)                    # _var_tot after each sample
    var_tot_new = ev_per_step[-1]
    prev_var_tot = ev_per_step[-2] if T > 1 else jnp.float32(var_tot)
    ratios = jnp.cumsum(d_new) / prev_var_tot
    exceeded = ratios > var_rel
    red_j = jnp.where(jnp.any(exceeded), jnp.argmax(exceeded), K)

    new_state = dict(
        v_unnorm=vu_new,          # self._v  (layout (K, D))
        v=vn_new,                 # self.v   (layout (K, D))
        d=d_new,                  # self.d
        var_tot=var_tot_new,      # self._var_tot
        reduced_dims=red_j,       # self._reduced_dims
    )
    return y, new_state


# ----------------------------------------------------------------------------
# Pure-numpy reference (straight port of the torch module, (D, K) layout)
# ----------------------------------------------------------------------------
def _reference_forward_seq(X, v_unnorm_kd, d, train_iteration, amn_params):
    V = np.asarray(v_unnorm_kd, np.float64).T.copy()          # (D, K)
    d = np.asarray(d, np.float64).copy()
    _, K = V.shape
    Vn = np.zeros_like(V)
    ys = []
    var_tot = 1.0
    for t in range(X.shape[0]):
        x = np.asarray(X[t:t + 1], np.float64)
        n = train_iteration + t + 1
        _i = float(n + 1)
        n1, n2, m, c = (float(v) for v in amn_params)
        if _i < n1:
            l = 0.0
        elif _i < n2:
            l = c * (_i - n1) / (n2 - n1)
        else:
            l = c + (_i - n2) / m
        w1 = (_i - 1.0 - l) / _i
        w2 = (1.0 + l) / _i
        r = x.copy()
        explained_var = 0.0
        for j in range(K):
            v = V[:, j:j + 1]
            dj = d[j]
            v = w1 * v + w2 * (r @ v) / dj * r.T
            dj_new = np.linalg.norm(v)
            vn = v / dj_new
            r = r - (r @ vn) * vn.T
            explained_var += dj_new
            V[:, j:j + 1] = v
            Vn[:, j:j + 1] = vn
            d[j] = dj_new
        var_tot = explained_var
        ys.append(x @ Vn)
    return np.concatenate(ys, 0), V, Vn, d, var_tot


# ----------------------------------------------------------------------------
if __name__ == "__main__":
    INPUT_DIM = 128     # D
    OUTPUT_DIM = 8      # K
    T = 4               # sequential samples in one fused call

    key = jax.random.PRNGKey(0)
    k_init, k_x = jax.random.split(key)

    # _check_params: init_eigen_vectors = 0.1 * randn(input_dim, output_dim)
    init_v_dk = 0.1 * jax.random.normal(k_init, (INPUT_DIM, OUTPUT_DIM),
                                        dtype=jnp.float32)     # torch (D, K)
    v_unnorm = jnp.transpose(init_v_dk)                         # kernel (K, D)
    d0 = jnp.sqrt(jnp.sum(v_unnorm * v_unnorm, axis=1))         # (K,)

    X = jax.random.normal(k_x, (T, INPUT_DIM), dtype=jnp.float32)

    y, state = online_pca_forward(X, v_unnorm, d0, train_iteration=0)
    y = jax.block_until_ready(y)

    # Cross-check against the numpy port of the torch module.
    y_ref, V_ref, Vn_ref, d_ref, var_ref = _reference_forward_seq(
        np.asarray(X), np.asarray(v_unnorm), np.asarray(d0), 0, (20, 200, 2000, 3))
    np.testing.assert_allclose(np.asarray(y), y_ref, rtol=1e-3, atol=1e-3)
    np.testing.assert_allclose(np.asarray(state["d"]), d_ref, rtol=1e-3, atol=1e-3)
    np.testing.assert_allclose(np.asarray(state["v_unnorm"]), V_ref.T, rtol=1e-3, atol=1e-3)
    np.testing.assert_allclose(np.asarray(state["v"]), Vn_ref.T, rtol=1e-3, atol=1e-3)
    np.testing.assert_allclose(float(state["var_tot"]), var_ref, rtol=1e-3, atol=1e-3)

    print("KERNEL_OK")
</pallas_src>

<mosaic_0001>
module attributes {stable_mosaic.version = 11 : i64} {
  func.func @_ccipca_kernel(%arg0: i32, %arg1: memref<4x2xf32, #tpu.memory_space<smem>>, %arg2: memref<1x1x128xf32, #tpu.memory_space<vmem>>, %arg3: memref<8x128xf32, #tpu.memory_space<vmem>>, %arg4: memref<8xf32, #tpu.memory_space<smem>>, %arg5: memref<1x8x1xf32, #tpu.memory_space<vmem>>, %arg6: memref<8x128xf32, #tpu.memory_space<vmem>>, %arg7: memref<8x128xf32, #tpu.memory_space<vmem>>, %arg8: memref<1x8x1xf32, #tpu.memory_space<vmem>>, %arg9: memref<8xf32, #tpu.memory_space<smem>>, %arg10: memref<8xf32, #tpu.memory_space<smem>>) attributes {dimension_semantics = [#tpu.dimension_semantics<arbitrary>], iteration_bounds = array<i64: 4>, scalar_prefetch = 0 : i64, scratch_operands = 2 : i64, tpu.core_type = #tpu.core_type<tc>, window_params = [{transform_indices = @transform_0, window_bounds = array<i64: 4, 2>}, {transform_indices = @transform_1, window_bounds = array<i64: 1, 1, 128>}, {pipeline_mode = #tpu.pipeline_mode<synchronous>, transform_indices = @transform_2, window_bounds = array<i64: 8, 128>}, {transform_indices = @transform_3, window_bounds = array<i64: 8>}, {transform_indices = @transform_4, window_bounds = array<i64: 1, 8, 1>}, {pipeline_mode = #tpu.pipeline_mode<synchronous>, transform_indices = @transform_5, window_bounds = array<i64: 8, 128>}, {pipeline_mode = #tpu.pipeline_mode<synchronous>, transform_indices = @transform_6, window_bounds = array<i64: 8, 128>}, {transform_indices = @transform_7, window_bounds = array<i64: 1, 8, 1>}]} {
    %c0_i32 = arith.constant 0 : i32
    %0 = arith.cmpi eq, %arg0, %c0_i32 : i32
    %1 = arith.extui %0 : i1 to i32
    %c0_i32_0 = arith.constant 0 : i32
    %2 = arith.cmpi ne, %1, %c0_i32_0 : i32
    scf.if %2 {
      %c0_99 = arith.constant 0 : index
      %c0_100 = arith.constant 0 : index
      %332 = vector.load %arg3[%c0_99, %c0_100] : memref<8x128xf32, #tpu.memory_space<vmem>>, vector<8x128xf32>
      %c0_101 = arith.constant 0 : index
      %c0_102 = arith.constant 0 : index
      %333 = vector.load %arg6[%c0_101, %c0_102] : memref<8x128xf32, #tpu.memory_space<vmem>>, vector<8x128xf32>
      tpu.vector_store %arg6[%c0_101, %c0_102], %332 {strides = array<i32>} : memref<8x128xf32, #tpu.memory_space<vmem>>, vector<8x128xf32>,
      %c0_103 = arith.constant 0 : index
      %334 = memref.load %arg4[%c0_103] : memref<8xf32, #tpu.memory_space<smem>>
      %335 = arith.mulf %334, %334 : f32
      %c0_104 = arith.constant 0 : index
      %336 = memref.load %arg9[%c0_104] : memref<8xf32, #tpu.memory_space<smem>>
      memref.store %335, %arg9[%c0_104] : memref<8xf32, #tpu.memory_space<smem>>
      %cst_105 = arith.constant 1.000000e+00 : f32
      %337 = arith.divf %cst_105, %334 : f32
      %c0_106 = arith.constant 0 : index
      %338 = memref.load %arg10[%c0_106] : memref<8xf32, #tpu.memory_space<smem>>
      memref.store %337, %arg10[%c0_106] : memref<8xf32, #tpu.memory_space<smem>>
      %c1_107 = arith.constant 1 : index
      %339 = memref.load %arg4[%c1_107] : memref<8xf32, #tpu.memory_space<smem>>
      %340 = arith.mulf %339, %339 : f32
      %c1_108 = arith.constant 1 : index
      %341 = memref.load %arg9[%c1_108] : memref<8xf32, #tpu.memory_space<smem>>
      memref.store %340, %arg9[%c1_108] : memref<8xf32, #tpu.memory_space<smem>>
      %cst_109 = arith.constant 1.000000e+00 : f32
      %342 = arith.divf %cst_109, %339 : f32
      %c1_110 = arith.constant 1 : index
      %343 = memref.load %arg10[%c1_110] : memref<8xf32, #tpu.memory_space<smem>>
      memref.store %342, %arg10[%c1_110] : memref<8xf32, #tpu.memory_space<smem>>
      %c2_111 = arith.constant 2 : index
      %344 = memref.load %arg4[%c2_111] : memref<8xf32, #tpu.memory_space<smem>>
      %345 = arith.mulf %344, %344 : f32
      %c2_112 = arith.constant 2 : index
      %346 = memref.load %arg9[%c2_112] : memref<8xf32, #tpu.memory_space<smem>>
      memref.store %345, %arg9[%c2_112] : memref<8xf32, #tpu.memory_space<smem>>
      %cst_113 = arith.constant 1.000000e+00 : f32
      %347 = arith.divf %cst_113, %344 : f32
      %c2_114 = arith.constant 2 : index
      %348 = memref.load %arg10[%c2_114] : memref<8xf32, #tpu.memory_space<smem>>
      memref.store %347, %arg10[%c2_114] : memref<8xf32, #tpu.memory_space<smem>>
      %c3_115 = arith.constant 3 : index
      %349 = memref.load %arg4[%c3_115] : memref<8xf32, #tpu.memory_space<smem>>
      %350 = arith.mulf %349, %349 : f32
      %c3_116 = arith.constant 3 : index
      %351 = memref.load %arg9[%c3_116] : memref<8xf32, #tpu.memory_space<smem>>
      memref.store %350, %arg9[%c3_116] : memref<8xf32, #tpu.memory_space<smem>>
      %cst_117 = arith.constant 1.000000e+00 : f32
      %352 = arith.divf %cst_117, %349 : f32
      %c3_118 = arith.constant 3 : index
      %353 = memref.load %arg10[%c3_118] : memref<8xf32, #tpu.memory_space<smem>>
      memref.store %352, %arg10[%c3_118] : memref<8xf32, #tpu.memory_space<smem>>
      %c4_119 = arith.constant 4 : index
      %354 = memref.load %arg4[%c4_119] : memref<8xf32, #tpu.memory_space<smem>>
      %355 = arith.mulf %354, %354 : f32
      %c4_120 = arith.constant 4 : index
      %356 = memref.load %arg9[%c4_120] : memref<8xf32, #tpu.memory_space<smem>>
      memref.store %355, %arg9[%c4_120] : memref<8xf32, #tpu.memory_space<smem>>
      %cst_121 = arith.constant 1.000000e+00 : f32
      %357 = arith.divf %cst_121, %354 : f32
      %c4_122 = arith.constant 4 : index
      %358 = memref.load %arg10[%c4_122] : memref<8xf32, #tpu.memory_space<smem>>
      memref.store %357, %arg10[%c4_122] : memref<8xf32, #tpu.memory_space<smem>>
      %c5_123 = arith.constant 5 : index
      %359 = memref.load %arg4[%c5_123] : memref<8xf32, #tpu.memory_space<smem>>
      %360 = arith.mulf %359, %359 : f32
      %c5_124 = arith.constant 5 : index
      %361 = memref.load %arg9[%c5_124] : memref<8xf32, #tpu.memory_space<smem>>
      memref.store %360, %arg9[%c5_124] : memref<8xf32, #tpu.memory_space<smem>>
      %cst_125 = arith.constant 1.000000e+00 : f32
      %362 = arith.divf %cst_125, %359 : f32
      %c5_126 = arith.constant 5 : index
      %363 = memref.load %arg10[%c5_126] : memref<8xf32, #tpu.memory_space<smem>>
      memref.store %362, %arg10[%c5_126] : memref<8xf32, #tpu.memory_space<smem>>
      %c6_127 = arith.constant 6 : index
      %364 = memref.load %arg4[%c6_127] : memref<8xf32, #tpu.memory_space<smem>>
      %365 = arith.mulf %364, %364 : f32
      %c6_128 = arith.constant 6 : index
      %366 = memref.load %arg9[%c6_128] : memref<8xf32, #tpu.memory_space<smem>>
      memref.store %365, %arg9[%c6_128] : memref<8xf32, #tpu.memory_space<smem>>
      %cst_129 = arith.constant 1.000000e+00 : f32
      %367 = arith.divf %cst_129, %364 : f32
      %c6_130 = arith.constant 6 : index
      %368 = memref.load %arg10[%c6_130] : memref<8xf32, #tpu.memory_space<smem>>
      memref.store %367, %arg10[%c6_130] : memref<8xf32, #tpu.memory_space<smem>>
      %c7_131 = arith.constant 7 : index
      %369 = memref.load %arg4[%c7_131] : memref<8xf32, #tpu.memory_space<smem>>
      %370 = arith.mulf %369, %369 : f32
      %c7_132 = arith.constant 7 : index
      %371 = memref.load %arg9[%c7_132] : memref<8xf32, #tpu.memory_space<smem>>
      memref.store %370, %arg9[%c7_132] : memref<8xf32, #tpu.memory_space<smem>>
      %cst_133 = arith.constant 1.000000e+00 : f32
      %372 = arith.divf %cst_133, %369 : f32
      %c7_134 = arith.constant 7 : index
      %373 = memref.load %arg10[%c7_134] : memref<8xf32, #tpu.memory_space<smem>>
      memref.store %372, %arg10[%c7_134] : memref<8xf32, #tpu.memory_space<smem>>
    } else {
    }
    %3 = arith.index_cast %arg0 : i32 to index
    %c0 = arith.constant 0 : index
    %4 = memref.load %arg1[%3, %c0] : memref<4x2xf32, #tpu.memory_space<smem>>
    %5 = arith.index_cast %arg0 : i32 to index
    %c1 = arith.constant 1 : index
    %6 = memref.load %arg1[%5, %c1] : memref<4x2xf32, #tpu.memory_space<smem>>
    %7 = arith.mulf %4, %4 : f32
    %cst = arith.constant 2.000000e+00 : f32
    %8 = arith.mulf %cst, %4 : f32
    %c0_1 = arith.constant 0 : index
    %c0_2 = arith.constant 0 : index
    %c0_3 = arith.constant 0 : index
    %9 = vector.load %arg2[%c0_1, %c0_2, %c0_3] : memref<1x1x128xf32, #tpu.memory_space<vmem>>, vector<1x1x128xf32>
    %10 = vector.shape_cast %9 : vector<1x1x128xf32> to vector<1x128xf32>
    %11 = arith.mulf %10, %10 : vector<1x128xf32>
    %12 = vector.shape_cast %11 : vector<1x128xf32> to vector<1x1x128xf32>
    %cst_4 = arith.constant dense<0.000000e+00> : vector<1xf32>
    %13 = vector.multi_reduction <add>, %12, %cst_4 [1, 2] : vector<1x1x128xf32> to vector<1xf32>
    %14 = vector.shape_cast %13 : vector<1xf32> to vector<1x1x1xf32>
    %15 = vector.extract %14[0, 0, 0] : f32 from vector<1x1x1xf32>
    %c0_5 = arith.constant 0 : index
    %c0_6 = arith.constant 0 : index
    %16 = vector.load %arg6[%c0_5, %c0_6] : memref<8x128xf32, #tpu.memory_space<vmem>>, vector<1x128xf32>
    %c0_7 = arith.constant 0 : index
    %17 = memref.load %arg9[%c0_7] : memref<8xf32, #tpu.memory_space<smem>>
    %c0_8 = arith.constant 0 : index
    %18 = memref.load %arg10[%c0_8] : memref<8xf32, #tpu.memory_space<smem>>
    %19 = arith.mulf %10, %16 : vector<1x128xf32>
    %20 = vector.shape_cast %19 : vector<1x128xf32> to vector<1x1x128xf32>
    %cst_9 = arith.constant dense<0.000000e+00> : vector<1xf32>
    %21 = vector.multi_reduction <add>, %20, %cst_9 [1, 2] : vector<1x1x128xf32> to vector<1xf32>
    %22 = vector.shape_cast %21 : vector<1xf32> to vector<1x1x1xf32>
    %23 = vector.extract %22[0, 0, 0] : f32 from vector<1x1x1xf32>
    %24 = arith.mulf %6, %23 : f32
    %25 = arith.mulf %24, %18 : f32
    %26 = vector.broadcast %4 : f32 to vector<1x128xf32>
    %27 = arith.mulf %26, %16 : vector<1x128xf32>
    %28 = vector.broadcast %25 : f32 to vector<1x128xf32>
    %29 = arith.mulf %28, %10 : vector<1x128xf32>
    %30 = arith.addf %27, %29 : vector<1x128xf32>
    %31 = arith.mulf %7, %17 : f32
    %32 = arith.mulf %8, %25 : f32
    %33 = arith.mulf %32, %23 : f32
    %34 = arith.addf %31, %33 : f32
    %35 = arith.mulf %25, %25 : f32
    %36 = arith.mulf %35, %15 : f32
    %37 = arith.addf %34, %36 : f32
    %38 = math.rsqrt %37 : f32
    %39 = arith.mulf %4, %23 : f32
    %40 = arith.mulf %25, %15 : f32
    %41 = arith.addf %39, %40 : f32
    %42 = arith.mulf %41, %38 : f32
    %c0_10 = arith.constant 0 : index
    %c0_11 = arith.constant 0 : index
    %43 = vector.load %arg6[%c0_10, %c0_11] : memref<8x128xf32, #tpu.memory_space<vmem>>, vector<1x128xf32>
    tpu.vector_store %arg6[%c0_10, %c0_11], %30 {strides = array<i32>} : memref<8x128xf32, #tpu.memory_space<vmem>>, vector<1x128xf32>,
    %44 = vector.broadcast %38 : f32 to vector<1x128xf32>
    %45 = arith.mulf %30, %44 : vector<1x128xf32>
    %c0_12 = arith.constant 0 : index
    %c0_13 = arith.constant 0 : index
    %46 = vector.load %arg7[%c0_12, %c0_13] : memref<8x128xf32, #tpu.memory_space<vmem>>, vector<1x128xf32>
    tpu.vector_store %arg7[%c0_12, %c0_13], %45 {strides = array<i32>} : memref<8x128xf32, #tpu.memory_space<vmem>>, vector<1x128xf32>,
    %c0_14 = arith.constant 0 : index
    %47 = memref.load %arg9[%c0_14] : memref<8xf32, #tpu.memory_space<smem>>
    memref.store %37, %arg9[%c0_14] : memref<8xf32, #tpu.memory_space<smem>>
    %c0_15 = arith.constant 0 : index
    %48 = memref.load %arg10[%c0_15] : memref<8xf32, #tpu.memory_space<smem>>
    memref.store %38, %arg10[%c0_15] : memref<8xf32, #tpu.memory_space<smem>>
    %49 = arith.mulf %42, %38 : f32
    %50 = vector.broadcast %49 : f32 to vector<1x128xf32>
    %51 = arith.mulf %50, %30 : vector<1x128xf32>
    %52 = arith.subf %10, %51 : vector<1x128xf32>
    %53 = arith.mulf %42, %42 : f32
    %54 = arith.subf %15, %53 : f32
    %c1_16 = arith.constant 1 : index
    %c0_17 = arith.constant 0 : index
    %55 = vector.load %arg6[%c1_16, %c0_17] : memref<8x128xf32, #tpu.memory_space<vmem>>, vector<1x128xf32>
    %c1_18 = arith.constant 1 : index
    %56 = memref.load %arg9[%c1_18] : memref<8xf32, #tpu.memory_space<smem>>
    %c1_19 = arith.constant 1 : index
    %57 = memref.load %arg10[%c1_19] : memref<8xf32, #tpu.memory_space<smem>>
    %58 = arith.mulf %52, %55 : vector<1x128xf32>
    %59 = vector.shape_cast %58 : vector<1x128xf32> to vector<1x1x128xf32>
    %cst_20 = arith.constant dense<0.000000e+00> : vector<1xf32>
    %60 = vector.multi_reduction <add>, %59, %cst_20 [1, 2] : vector<1x1x128xf32> to vector<1xf32>
    %61 = vector.shape_cast %60 : vector<1xf32> to vector<1x1x1xf32>
    %62 = vector.extract %61[0, 0, 0] : f32 from vector<1x1x1xf32>
    %63 = arith.mulf %6, %62 : f32
    %64 = arith.mulf %63, %57 : f32
    %65 = vector.broadcast %4 : f32 to vector<1x128xf32>
    %66 = arith.mulf %65, %55 : vector<1x128xf32>
    %67 = vector.broadcast %64 : f32 to vector<1x128xf32>
    %68 = arith.mulf %67, %52 : vector<1x128xf32>
    %69 = arith.addf %66, %68 : vector<1x128xf32>
    %70 = arith.mulf %7, %56 : f32
    %71 = arith.mulf %8, %64 : f32
    %72 = arith.mulf %71, %62 : f32
    %73 = arith.addf %70, %72 : f32
    %74 = arith.mulf %64, %64 : f32
    %75 = arith.mulf %74, %54 : f32
    %76 = arith.addf %73, %75 : f32
    %77 = math.rsqrt %76 : f32
    %78 = arith.mulf %4, %62 : f32
    %79 = arith.mulf %64, %54 : f32
    %80 = arith.addf %78, %79 : f32
    %81 = arith.mulf %80, %77 : f32
    %c1_21 = arith.constant 1 : index
    %c0_22 = arith.constant 0 : index
    %82 = vector.load %arg6[%c1_21, %c0_22] : memref<8x128xf32, #tpu.memory_space<vmem>>, vector<1x128xf32>
    tpu.vector_store %arg6[%c1_21, %c0_22], %69 {strides = array<i32>} : memref<8x128xf32, #tpu.memory_space<vmem>>, vector<1x128xf32>,
    %83 = vector.broadcast %77 : f32 to vector<1x128xf32>
    %84 = arith.mulf %69, %83 : vector<1x128xf32>
    %c1_23 = arith.constant 1 : index
    %c0_24 = arith.constant 0 : index
    %85 = vector.load %arg7[%c1_23, %c0_24] : memref<8x128xf32, #tpu.memory_space<vmem>>, vector<1x128xf32>
    tpu.vector_store %arg7[%c1_23, %c0_24], %84 {strides = array<i32>} : memref<8x128xf32, #tpu.memory_space<vmem>>, vector<1x128xf32>,
    %c1_25 = arith.constant 1 : index
    %86 = memref.load %arg9[%c1_25] : memref<8xf32, #tpu.memory_space<smem>>
    memref.store %76, %arg9[%c1_25] : memref<8xf32, #tpu.memory_space<smem>>
    %c1_26 = arith.constant 1 : index
    %87 = memref.load %arg10[%c1_26] : memref<8xf32, #tpu.memory_space<smem>>
    memref.store %77, %arg10[%c1_26] : memref<8xf32, #tpu.memory_space<smem>>
    %88 = arith.mulf %81, %77 : f32
    %89 = vector.broadcast %88 : f32 to vector<1x128xf32>
    %90 = arith.mulf %89, %69 : vector<1x128xf32>
    %91 = arith.subf %52, %90 : vector<1x128xf32>
    %92 = arith.mulf %81, %81 : f32
    %93 = arith.subf %54, %92 : f32
    %c2 = arith.constant 2 : index
    %c0_27 = arith.constant 0 : index
    %94 = vector.load %arg6[%c2, %c0_27] : memref<8x128xf32, #tpu.memory_space<vmem>>, vector<1x128xf32>
    %c2_28 = arith.constant 2 : index
    %95 = memref.load %arg9[%c2_28] : memref<8xf32, #tpu.memory_space<smem>>
    %c2_29 = arith.constant 2 : index
    %96 = memref.load %arg10[%c2_29] : memref<8xf32, #tpu.memory_space<smem>>
    %97 = arith.mulf %91, %94 : vector<1x128xf32>
    %98 = vector.shape_cast %97 : vector<1x128xf32> to vector<1x1x128xf32>
    %cst_30 = arith.constant dense<0.000000e+00> : vector<1xf32>
    %99 = vector.multi_reduction <add>, %98, %cst_30 [1, 2] : vector<1x1x128xf32> to vector<1xf32>
    %100 = vector.shape_cast %99 : vector<1xf32> to vector<1x1x1xf32>
    %101 = vector.extract %100[0, 0, 0] : f32 from vector<1x1x1xf32>
    %102 = arith.mulf %6, %101 : f32
    %103 = arith.mulf %102, %96 : f32
    %104 = vector.broadcast %4 : f32 to vector<1x128xf32>
    %105 = arith.mulf %104, %94 : vector<1x128xf32>
    %106 = vector.broadcast %103 : f32 to vector<1x128xf32>
    %107 = arith.mulf %106, %91 : vector<1x128xf32>
    %108 = arith.addf %105, %107 : vector<1x128xf32>
    %109 = arith.mulf %7, %95 : f32
    %110 = arith.mulf %8, %103 : f32
    %111 = arith.mulf %110, %101 : f32
    %112 = arith.addf %109, %111 : f32
    %113 = arith.mulf %103, %103 : f32
    %114 = arith.mulf %113, %93 : f32
    %115 = arith.addf %112, %114 : f32
    %116 = math.rsqrt %115 : f32
    %117 = arith.mulf %4, %101 : f32
    %118 = arith.mulf %103, %93 : f32
    %119 = arith.addf %117, %118 : f32
    %120 = arith.mulf %119, %116 : f32
    %c2_31 = arith.constant 2 : index
    %c0_32 = arith.constant 0 : index
    %121 = vector.load %arg6[%c2_31, %c0_32] : memref<8x128xf32, #tpu.memory_space<vmem>>, vector<1x128xf32>
    tpu.vector_store %arg6[%c2_31, %c0_32], %108 {strides = array<i32>} : memref<8x128xf32, #tpu.memory_space<vmem>>, vector<1x128xf32>,
    %122 = vector.broadcast %116 : f32 to vector<1x128xf32>
    %123 = arith.mulf %108, %122 : vector<1x128xf32>
    %c2_33 = arith.constant 2 : index
    %c0_34 = arith.constant 0 : index
    %124 = vector.load %arg7[%c2_33, %c0_34] : memref<8x128xf32, #tpu.memory_space<vmem>>, vector<1x128xf32>
    tpu.vector_store %arg7[%c2_33, %c0_34], %123 {strides = array<i32>} : memref<8x128xf32, #tpu.memory_space<vmem>>, vector<1x128xf32>,
    %c2_35 = arith.constant 2 : index
    %125 = memref.load %arg9[%c2_35] : memref<8xf32, #tpu.memory_space<smem>>
    memref.store %115, %arg9[%c2_35] : memref<8xf32, #tpu.memory_space<smem>>
    %c2_36 = arith.constant 2 : index
    %126 = memref.load %arg10[%c2_36] : memref<8xf32, #tpu.memory_space<smem>>
    memref.store %116, %arg10[%c2_36] : memref<8xf32, #tpu.memory_space<smem>>
    %127 = arith.mulf %120, %116 : f32
    %128 = vector.broadcast %127 : f32 to vector<1x128xf32>
    %129 = arith.mulf %128, %108 : vector<1x128xf32>
    %130 = arith.subf %91, %129 : vector<1x128xf32>
    %131 = arith.mulf %120, %120 : f32
    %132 = arith.subf %93, %131 : f32
    %c3 = arith.constant 3 : index
    %c0_37 = arith.constant 0 : index
    %133 = vector.load %arg6[%c3, %c0_37] : memref<8x128xf32, #tpu.memory_space<vmem>>, vector<1x128xf32>
    %c3_38 = arith.constant 3 : index
    %134 = memref.load %arg9[%c3_38] : memref<8xf32, #tpu.memory_space<smem>>
    %c3_39 = arith.constant 3 : index
    %135 = memref.load %arg10[%c3_39] : memref<8xf32, #tpu.memory_space<smem>>
    %136 = arith.mulf %130, %133 : vector<1x128xf32>
    %137 = vector.shape_cast %136 : vector<1x128xf32> to vector<1x1x128xf32>
    %cst_40 = arith.constant dense<0.000000e+00> : vector<1xf32>
    %138 = vector.multi_reduction <add>, %137, %cst_40 [1, 2] : vector<1x1x128xf32> to vector<1xf32>
    %139 = vector.shape_cast %138 : vector<1xf32> to vector<1x1x1xf32>
    %140 = vector.extract %139[0, 0, 0] : f32 from vector<1x1x1xf32>
    %141 = arith.mulf %6, %140 : f32
    %142 = arith.mulf %141, %135 : f32
    %143 = vector.broadcast %4 : f32 to vector<1x128xf32>
    %144 = arith.mulf %143, %133 : vector<1x128xf32>
    %145 = vector.broadcast %142 : f32 to vector<1x128xf32>
    %146 = arith.mulf %145, %130 : vector<1x128xf32>
    %147 = arith.addf %144, %146 : vector<1x128xf32>
    %148 = arith.mulf %7, %134 : f32
    %149 = arith.mulf %8, %142 : f32
    %150 = arith.mulf %149, %140 : f32
    %151 = arith.addf %148, %150 : f32
    %152 = arith.mulf %142, %142 : f32
    %153 = arith.mulf %152, %132 : f32
    %154 = arith.addf %151, %153 : f32
    %155 = math.rsqrt %154 : f32
    %156 = arith.mulf %4, %140 : f32
    %157 = arith.mulf %142, %132 : f32
    %158 = arith.addf %156, %157 : f32
    %159 = arith.mulf %158, %155 : f32
    %c3_41 = arith.constant 3 : index
    %c0_42 = arith.constant 0 : index
    %160 = vector.load %arg6[%c3_41, %c0_42] : memref<8x128xf32, #tpu.memory_space<vmem>>, vector<1x128xf32>
    tpu.vector_store %arg6[%c3_41, %c0_42], %147 {strides = array<i32>} : memref<8x128xf32, #tpu.memory_space<vmem>>, vector<1x128xf32>,
    %161 = vector.broadcast %155 : f32 to vector<1x128xf32>
    %162 = arith.mulf %147, %161 : vector<1x128xf32>
    %c3_43 = arith.constant 3 : index
    %c0_44 = arith.constant 0 : index
    %163 = vector.load %arg7[%c3_43, %c0_44] : memref<8x128xf32, #tpu.memory_space<vmem>>, vector<1x128xf32>
    tpu.vector_store %arg7[%c3_43, %c0_44], %162 {strides = array<i32>} : memref<8x128xf32, #tpu.memory_space<vmem>>, vector<1x128xf32>,
    %c3_45 = arith.constant 3 : index
    %164 = memref.load %arg9[%c3_45] : memref<8xf32, #tpu.memory_space<smem>>
    memref.store %154, %arg9[%c3_45] : memref<8xf32, #tpu.memory_space<smem>>
    %c3_46 = arith.constant 3 : index
    %165 = memref.load %arg10[%c3_46] : memref<8xf32, #tpu.memory_space<smem>>
    memref.store %155, %arg10[%c3_46] : memref<8xf32, #tpu.memory_space<smem>>
    %166 = arith.mulf %159, %155 : f32
    %167 = vector.broadcast %166 : f32 to vector<1x128xf32>
    %168 = arith.mulf %167, %147 : vector<1x128xf32>
    %169 = arith.subf %130, %168 : vector<1x128xf32>
    %170 = arith.mulf %159, %159 : f32
    %171 = arith.subf %132, %170 : f32
    %c4 = arith.constant 4 : index
    %c0_47 = arith.constant 0 : index
    %172 = vector.load %arg6[%c4, %c0_47] : memref<8x128xf32, #tpu.memory_space<vmem>>, vector<1x128xf32>
    %c4_48 = arith.constant 4 : index
    %173 = memref.load %arg9[%c4_48] : memref<8xf32, #tpu.memory_space<smem>>
    %c4_49 = arith.constant 4 : index
    %174 = memref.load %arg10[%c4_49] : memref<8xf32, #tpu.memory_space<smem>>
    %175 = arith.mulf %169, %172 : vector<1x128xf32>
    %176 = vector.shape_cast %175 : vector<1x128xf32> to vector<1x1x128xf32>
    %cst_50 = arith.constant dense<0.000000e+00> : vector<1xf32>
    %177 = vector.multi_reduction <add>, %176, %cst_50 [1, 2] : vector<1x1x128xf32> to vector<1xf32>
    %178 = vector.shape_cast %177 : vector<1xf32> to vector<1x1x1xf32>
    %179 = vector.extract %178[0, 0, 0] : f32 from vector<1x1x1xf32>
    %180 = arith.mulf %6, %179 : f32
    %181 = arith.mulf %180, %174 : f32
    %182 = vector.broadcast %4 : f32 to vector<1x128xf32>
    %183 = arith.mulf %182, %172 : vector<1x128xf32>
    %184 = vector.broadcast %181 : f32 to vector<1x128xf32>
    %185 = arith.mulf %184, %169 : vector<1x128xf32>
    %186 = arith.addf %183, %185 : vector<1x128xf32>
    %187 = arith.mulf %7, %173 : f32
    %188 = arith.mulf %8, %181 : f32
    %189 = arith.mulf %188, %179 : f32
    %190 = arith.addf %187, %189 : f32
    %191 = arith.mulf %181, %181 : f32
    %192 = arith.mulf %191, %171 : f32
    %193 = arith.addf %190, %192 : f32
    %194 = math.rsqrt %193 : f32
    %195 = arith.mulf %4, %179 : f32
    %196 = arith.mulf %181, %171 : f32
    %197 = arith.addf %195, %196 : f32
    %198 = arith.mulf %197, %194 : f32
    %c4_51 = arith.constant 4 : index
    %c0_52 = arith.constant 0 : index
    %199 = vector.load %arg6[%c4_51, %c0_52] : memref<8x128xf32, #tpu.memory_space<vmem>>, vector<1x128xf32>
    tpu.vector_store %arg6[%c4_51, %c0_52], %186 {strides = array<i32>} : memref<8x128xf32, #tpu.memory_space<vmem>>, vector<1x128xf32>,
    %200 = vector.broadcast %194 : f32 to vector<1x128xf32>
    %201 = arith.mulf %186, %200 : vector<1x128xf32>
    %c4_53 = arith.constant 4 : index
    %c0_54 = arith.constant 0 : index
    %202 = vector.load %arg7[%c4_53, %c0_54] : memref<8x128xf32, #tpu.memory_space<vmem>>, vector<1x128xf32>
    tpu.vector_store %arg7[%c4_53, %c0_54], %201 {strides = array<i32>} : memref<8x128xf32, #tpu.memory_space<vmem>>, vector<1x128xf32>,
    %c4_55 = arith.constant 4 : index
    %203 = memref.load %arg9[%c4_55] : memref<8xf32, #tpu.memory_space<smem>>
    memref.store %193, %arg9[%c4_55] : memref<8xf32, #tpu.memory_space<smem>>
    %c4_56 = arith.constant 4 : index
    %204 = memref.load %arg10[%c4_56] : memref<8xf32, #tpu.memory_space<smem>>
    memref.store %194, %arg10[%c4_56] : memref<8xf32, #tpu.memory_space<smem>>
    %205 = arith.mulf %198, %194 : f32
    %206 = vector.broadcast %205 : f32 to vector<1x128xf32>
    %207 = arith.mulf %206, %186 : vector<1x128xf32>
    %208 = arith.subf %169, %207 : vector<1x128xf32>
    %209 = arith.mulf %198, %198 : f32
    %210 = arith.subf %171, %209 : f32
    %c5 = arith.constant 5 : index
    %c0_57 = arith.constant 0 : index
    %211 = vector.load %arg6[%c5, %c0_57] : memref<8x128xf32, #tpu.memory_space<vmem>>, vector<1x128xf32>
    %c5_58 = arith.constant 5 : index
    %212 = memref.load %arg9[%c5_58] : memref<8xf32, #tpu.memory_space<smem>>
    %c5_59 = arith.constant 5 : index
    %213 = memref.load %arg10[%c5_59] : memref<8xf32, #tpu.memory_space<smem>>
    %214 = arith.mulf %208, %211 : vector<1x128xf32>
    %215 = vector.shape_cast %214 : vector<1x128xf32> to vector<1x1x128xf32>
    %cst_60 = arith.constant dense<0.000000e+00> : vector<1xf32>
    %216 = vector.multi_reduction <add>, %215, %cst_60 [1, 2] : vector<1x1x128xf32> to vector<1xf32>
    %217 = vector.shape_cast %216 : vector<1xf32> to vector<1x1x1xf32>
    %218 = vector.extract %217[0, 0, 0] : f32 from vector<1x1x1xf32>
    %219 = arith.mulf %6, %218 : f32
    %220 = arith.mulf %219, %213 : f32
    %221 = vector.broadcast %4 : f32 to vector<1x128xf32>
    %222 = arith.mulf %221, %211 : vector<1x128xf32>
    %223 = vector.broadcast %220 : f32 to vector<1x128xf32>
    %224 = arith.mulf %223, %208 : vector<1x128xf32>
    %225 = arith.addf %222, %224 : vector<1x128xf32>
    %226 = arith.mulf %7, %212 : f32
    %227 = arith.mulf %8, %220 : f32
    %228 = arith.mulf %227, %218 : f32
    %229 = arith.addf %226, %228 : f32
    %230 = arith.mulf %220, %220 : f32
    %231 = arith.mulf %230, %210 : f32
    %232 = arith.addf %229, %231 : f32
    %233 = math.rsqrt %232 : f32
    %234 = arith.mulf %4, %218 : f32
    %235 = arith.mulf %220, %210 : f32
    %236 = arith.addf %234, %235 : f32
    %237 = arith.mulf %236, %233 : f32
    %c5_61 = arith.constant 5 : index
    %c0_62 = arith.constant 0 : index
    %238 = vector.load %arg6[%c5_61, %c0_62] : memref<8x128xf32, #tpu.memory_space<vmem>>, vector<1x128xf32>
    tpu.vector_store %arg6[%c5_61, %c0_62], %225 {strides = array<i32>} : memref<8x128xf32, #tpu.memory_space<vmem>>, vector<1x128xf32>,
    %239 = vector.broadcast %233 : f32 to vector<1x128xf32>
    %240 = arith.mulf %225, %239 : vector<1x128xf32>
    %c5_63 = arith.constant 5 : index
    %c0_64 = arith.constant 0 : index
    %241 = vector.load %arg7[%c5_63, %c0_64] : memref<8x128xf32, #tpu.memory_space<vmem>>, vector<1x128xf32>
    tpu.vector_store %arg7[%c5_63, %c0_64], %240 {strides = array<i32>} : memref<8x128xf32, #tpu.memory_space<vmem>>, vector<1x128xf32>,
    %c5_65 = arith.constant 5 : index
    %242 = memref.load %arg9[%c5_65] : memref<8xf32, #tpu.memory_space<smem>>
    memref.store %232, %arg9[%c5_65] : memref<8xf32, #tpu.memory_space<smem>>
    %c5_66 = arith.constant 5 : index
    %243 = memref.load %arg10[%c5_66] : memref<8xf32, #tpu.memory_space<smem>>
    memref.store %233, %arg10[%c5_66] : memref<8xf32, #tpu.memory_space<smem>>
    %244 = arith.mulf %237, %233 : f32
    %245 = vector.broadcast %244 : f32 to vector<1x128xf32>
    %246 = arith.mulf %245, %225 : vector<1x128xf32>
    %247 = arith.subf %208, %246 : vector<1x128xf32>
    %248 = arith.mulf %237, %237 : f32
    %249 = arith.subf %210, %248 : f32
    %c6 = arith.constant 6 : index
    %c0_67 = arith.constant 0 : index
    %250 = vector.load %arg6[%c6, %c0_67] : memref<8x128xf32, #tpu.memory_space<vmem>>, vector<1x128xf32>
    %c6_68 = arith.constant 6 : index
    %251 = memref.load %arg9[%c6_68] : memref<8xf32, #tpu.memory_space<smem>>
    %c6_69 = arith.constant 6 : index
    %252 = memref.load %arg10[%c6_69] : memref<8xf32, #tpu.memory_space<smem>>
    %253 = arith.mulf %247, %250 : vector<1x128xf32>
    %254 = vector.shape_cast %253 : vector<1x128xf32> to vector<1x1x128xf32>
    %cst_70 = arith.constant dense<0.000000e+00> : vector<1xf32>
    %255 = vector.multi_reduction <add>, %254, %cst_70 [1, 2] : vector<1x1x128xf32> to vector<1xf32>
    %256 = vector.shape_cast %255 : vector<1xf32> to vector<1x1x1xf32>
    %257 = vector.extract %256[0, 0, 0] : f32 from vector<1x1x1xf32>
    %258 = arith.mulf %6, %257 : f32
    %259 = arith.mulf %258, %252 : f32
    %260 = vector.broadcast %4 : f32 to vector<1x128xf32>
    %261 = arith.mulf %260, %250 : vector<1x128xf32>
    %262 = vector.broadcast %259 : f32 to vector<1x128xf32>
    %263 = arith.mulf %262, %247 : vector<1x128xf32>
    %264 = arith.addf %261, %263 : vector<1x128xf32>
    %265 = arith.mulf %7, %251 : f32
    %266 = arith.mulf %8, %259 : f32
    %267 = arith.mulf %266, %257 : f32
    %268 = arith.addf %265, %267 : f32
    %269 = arith.mulf %259, %259 : f32
    %270 = arith.mulf %269, %249 : f32
    %271 = arith.addf %268, %270 : f32
    %272 = math.rsqrt %271 : f32
    %273 = arith.mulf %4, %257 : f32
    %274 = arith.mulf %259, %249 : f32
    %275 = arith.addf %273, %274 : f32
    %276 = arith.mulf %275, %272 : f32
    %c6_71 = arith.constant 6 : index
    %c0_72 = arith.constant 0 : index
    %277 = vector.load %arg6[%c6_71, %c0_72] : memref<8x128xf32, #tpu.memory_space<vmem>>, vector<1x128xf32>
    tpu.vector_store %arg6[%c6_71, %c0_72], %264 {strides = array<i32>} : memref<8x128xf32, #tpu.memory_space<vmem>>, vector<1x128xf32>,
    %278 = vector.broadcast %272 : f32 to vector<1x128xf32>
    %279 = arith.mulf %264, %278 : vector<1x128xf32>
    %c6_73 = arith.constant 6 : index
    %c0_74 = arith.constant 0 : index
    %280 = vector.load %arg7[%c6_73, %c0_74] : memref<8x128xf32, #tpu.memory_space<vmem>>, vector<1x128xf32>
    tpu.vector_store %arg7[%c6_73, %c0_74], %279 {strides = array<i32>} : memref<8x128xf32, #tpu.memory_space<vmem>>, vector<1x128xf32>,
    %c6_75 = arith.constant 6 : index
    %281 = memref.load %arg9[%c6_75] : memref<8xf32, #tpu.memory_space<smem>>
    memref.store %271, %arg9[%c6_75] : memref<8xf32, #tpu.memory_space<smem>>
    %c6_76 = arith.constant 6 : index
    %282 = memref.load %arg10[%c6_76] : memref<8xf32, #tpu.memory_space<smem>>
    memref.store %272, %arg10[%c6_76] : memref<8xf32, #tpu.memory_space<smem>>
    %283 = arith.mulf %276, %272 : f32
    %284 = vector.broadcast %283 : f32 to vector<1x128xf32>
    %285 = arith.mulf %284, %264 : vector<1x128xf32>
    %286 = arith.subf %247, %285 : vector<1x128xf32>
    %287 = arith.mulf %276, %276 : f32
    %288 = arith.subf %249, %287 : f32
    %c7 = arith.constant 7 : index
    %c0_77 = arith.constant 0 : index
    %289 = vector.load %arg6[%c7, %c0_77] : memref<8x128xf32, #tpu.memory_space<vmem>>, vector<1x128xf32>
    %c7_78 = arith.constant 7 : index
    %290 = memref.load %arg9[%c7_78] : memref<8xf32, #tpu.memory_space<smem>>
    %c7_79 = arith.constant 7 : index
    %291 = memref.load %arg10[%c7_79] : memref<8xf32, #tpu.memory_space<smem>>
    %292 = arith.mulf %286, %289 : vector<1x128xf32>
    %293 = vector.shape_cast %292 : vector<1x128xf32> to vector<1x1x128xf32>
    %cst_80 = arith.constant dense<0.000000e+00> : vector<1xf32>
    %294 = vector.multi_reduction <add>, %293, %cst_80 [1, 2] : vector<1x1x128xf32> to vector<1xf32>
    %295 = vector.shape_cast %294 : vector<1xf32> to vector<1x1x1xf32>
    %296 = vector.extract %295[0, 0, 0] : f32 from vector<1x1x1xf32>
    %297 = arith.mulf %6, %296 : f32
    %298 = arith.mulf %297, %291 : f32
    %299 = vector.broadcast %4 : f32 to vector<1x128xf32>
    %300 = arith.mulf %299, %289 : vector<1x128xf32>
    %301 = vector.broadcast %298 : f32 to vector<1x128xf32>
    %302 = arith.mulf %301, %286 : vector<1x128xf32>
    %303 = arith.addf %300, %302 : vector<1x128xf32>
    %304 = arith.mulf %7, %290 : f32
    %305 = arith.mulf %8, %298 : f32
    %306 = arith.mulf %305, %296 : f32
    %307 = arith.addf %304, %306 : f32
    %308 = arith.mulf %298, %298 : f32
    %309 = arith.mulf %308, %288 : f32
    %310 = arith.addf %307, %309 : f32
    %311 = math.rsqrt %310 : f32
    %c7_81 = arith.constant 7 : index
    %c0_82 = arith.constant 0 : index
    %312 = vector.load %arg6[%c7_81, %c0_82] : memref<8x128xf32, #tpu.memory_space<vmem>>, vector<1x128xf32>
    tpu.vector_store %arg6[%c7_81, %c0_82], %303 {strides = array<i32>} : memref<8x128xf32, #tpu.memory_space<vmem>>, vector<1x128xf32>,
    %313 = vector.broadcast %311 : f32 to vector<1x128xf32>
    %314 = arith.mulf %303, %313 : vector<1x128xf32>
    %c7_83 = arith.constant 7 : index
    %c0_84 = arith.constant 0 : index
    %315 = vector.load %arg7[%c7_83, %c0_84] : memref<8x128xf32, #tpu.memory_space<vmem>>, vector<1x128xf32>
    tpu.vector_store %arg7[%c7_83, %c0_84], %314 {strides = array<i32>} : memref<8x128xf32, #tpu.memory_space<vmem>>, vector<1x128xf32>,
    %c7_85 = arith.constant 7 : index
    %316 = memref.load %arg9[%c7_85] : memref<8xf32, #tpu.memory_space<smem>>
    memref.store %310, %arg9[%c7_85] : memref<8xf32, #tpu.memory_space<smem>>
    %c7_86 = arith.constant 7 : index
    %317 = memref.load %arg10[%c7_86] : memref<8xf32, #tpu.memory_space<smem>>
    memref.store %311, %arg10[%c7_86] : memref<8xf32, #tpu.memory_space<smem>>
    %c0_87 = arith.constant 0 : index
    %c0_88 = arith.constant 0 : index
    %318 = vector.load %arg6[%c0_87, %c0_88] : memref<8x128xf32, #tpu.memory_space<vmem>>, vector<8x128xf32>
    %319 = arith.mulf %318, %318 : vector<8x128xf32>
    %cst_89 = arith.constant dense<0.000000e+00> : vector<8xf32>
    %320 = vector.multi_reduction <add>, %319, %cst_89 [1] : vector<8x128xf32> to vector<8xf32>
    %321 = vector.shape_cast %320 : vector<8xf32> to vector<8x1xf32>
    %322 = math.sqrt %321 : vector<8x1xf32>
    %323 = vector.shape_cast %322 : vector<8x1xf32> to vector<1x8x1xf32>
    %c0_90 = arith.constant 0 : index
    %c0_91 = arith.constant 0 : index
    %c0_92 = arith.constant 0 : index
    %324 = vector.load %arg8[%c0_90, %c0_91, %c0_92] : memref<1x8x1xf32, #tpu.memory_space<vmem>>, vector<1x8x1xf32>
    tpu.vector_store %arg8[%c0_90, %c0_91, %c0_92], %323 {strides = array<i32>} : memref<1x8x1xf32, #tpu.memory_space<vmem>>, vector<1x8x1xf32>,
    %c0_93 = arith.constant 0 : index
    %c0_94 = arith.constant 0 : index
    %325 = vector.load %arg7[%c0_93, %c0_94] : memref<8x128xf32, #tpu.memory_space<vmem>>, vector<8x128xf32>
    %326 = vector.broadcast %10 : vector<1x128xf32> to vector<8x128xf32>
    %327 = arith.mulf %326, %325 : vector<8x128xf32>
    %cst_95 = arith.constant dense<0.000000e+00> : vector<8xf32>
    %328 = vector.multi_reduction <add>, %327, %cst_95 [1] : vector<8x128xf32> to vector<8xf32>
    %329 = vector.shape_cast %328 : vector<8xf32> to vector<8x1xf32>
    %330 = vector.shape_cast %329 : vector<8x1xf32> to vector<1x8x1xf32>
    %c0_96 = arith.constant 0 : index
    %c0_97 = arith.constant 0 : index
    %c0_98 = arith.constant 0 : index
    %331 = vector.load %arg5[%c0_96, %c0_97, %c0_98] : memref<1x8x1xf32, #tpu.memory_space<vmem>>, vector<1x8x1xf32>
    tpu.vector_store %arg5[%c0_96, %c0_97, %c0_98], %330 {strides = array<i32>} : memref<1x8x1xf32, #tpu.memory_space<vmem>>, vector<1x8x1xf32>,
    return
  }
  func.func @transform_0(%arg0: i32) -> (i32, i32) {
    %c0_i32 = arith.constant 0 : i32
    %c0_i32_0 = arith.constant 0 : i32
    %c0_i32_1 = arith.constant 0 : i32
    return %c0_i32, %c0_i32_0 : i32, i32
  }
  func.func @transform_1(%arg0: i32) -> (i32, i32, i32) {
    %c0_i32 = arith.constant 0 : i32
    %c0_i32_0 = arith.constant 0 : i32
    %c0_i32_1 = arith.constant 0 : i32
    return %arg0, %c0_i32, %c0_i32_0 : i32, i32, i32
  }
  func.func @transform_2(%arg0: i32) -> (i32, i32) {
    %c0_i32 = arith.constant 0 : i32
    %c0_i32_0 = arith.constant 0 : i32
    %c0_i32_1 = arith.constant 0 : i32
    return %c0_i32, %c0_i32_0 : i32, i32
  }
  func.func @transform_3(%arg0: i32) -> i32 {
    %c0_i32 = arith.constant 0 : i32
    %c0_i32_0 = arith.constant 0 : i32
    return %c0_i32 : i32
  }
  func.func @transform_4(%arg0: i32) -> (i32, i32, i32) {
    %c0_i32 = arith.constant 0 : i32
    %c0_i32_0 = arith.constant 0 : i32
    %c0_i32_1 = arith.constant 0 : i32
    return %arg0, %c0_i32, %c0_i32_0 : i32, i32, i32
  }
  func.func @transform_5(%arg0: i32) -> (i32, i32) {
    %c0_i32 = arith.constant 0 : i32
    %c0_i32_0 = arith.constant 0 : i32
    %c0_i32_1 = arith.constant 0 : i32
    return %c0_i32, %c0_i32_0 : i32, i32
  }
  func.func @transform_6(%arg0: i32) -> (i32, i32) {
    %c0_i32 = arith.constant 0 : i32
    %c0_i32_0 = arith.constant 0 : i32
    %c0_i32_1 = arith.constant 0 : i32
    return %c0_i32, %c0_i32_0 : i32, i32
  }
  func.func @transform_7(%arg0: i32) -> (i32, i32, i32) {
    %c0_i32 = arith.constant 0 : i32
    %c0_i32_0 = arith.constant 0 : i32
    %c0_i32_1 = arith.constant 0 : i32
    return %arg0, %c0_i32, %c0_i32_0 : i32, i32, i32
  }
}

</mosaic_0001>

<llo_original>
// kernel: tpu_custom_call.1
$region0: #{tpu_custom_call.1}
  #allocation0 [shape = 'u32[]', space=smem, size = 0x4, offset = 0x4, fixed_abs, tag = 'smem constant byte address 0x4 - core index']
  #allocation1 [shape = 'u32[144,128]{1,0:T(1,128)}', space=vmem, size = 0x12000, scoped, tag = 'internal scratch']
  #allocation2 [shape = 'f32[8]{0:T(128)}', space=smem, size = 0x200, scoped, tag = 'scratch operand']
  #allocation3 [shape = 'f32[8]{0:T(128)}', space=smem, size = 0x200, scoped, tag = 'scratch operand']
  %s0 = inlined_call_operand.vmem [shape: f32[4,2], index: 0, kind: input, shape index: {}]
  %s1 = inlined_call_operand.hbm [shape: f32[4,1,128], index: 1, kind: input, shape index: {}]
  %s2 = inlined_call_operand.vmem [shape: f32[8,128], index: 2, kind: input, shape index: {}]
  %s3 = inlined_call_operand.vmem [shape: f32[8], index: 3, kind: input, shape index: {}]
  %s4 = inlined_call_operand.vmem [shape: f32[4,8,1], index: 4, kind: output, shape index: {0}]
  %s5 = inlined_call_operand.hbm [shape: f32[8,128], index: 5, kind: output, shape index: {1}]
  %s6 = inlined_call_operand.hbm [shape: f32[8,128], index: 6, kind: output, shape index: {2}]
  %s7 = inlined_call_operand.vmem [shape: f32[4,8,1], index: 7, kind: output, shape index: {3}]
  %8 = xla_tuple %s4, %s5, %s6, %s7
  %s9 = sld [smem:[#allocation0]]
  $region89: #{tpu_custom_call.1} parent=0
    _
  %s11 = ssub.s32 1, %s9
  %s12 = scalar_select 0, %s11, %s9
  $region1: #{tpu_custom_call.1} parent=0
    #allocation4 [shape = 'u8[2048]{0}', space=smem, size = 0x800, scoped, tag = 'input window, operand 0, single buffered']
    #allocation5 [shape = 's32[2]{0}', space=sflag, size = 0x8, scoped, tag = 'scoped memory for tpu_custom_call.1']
    #allocation6 [shape = 's32[2]{0}', space=sflag, size = 0x8, scoped, tag = 'scoped memory for tpu_custom_call.1']
    #allocation7 [shape = 's32[2]{0}', space=sflag, size = 0x8, scoped, tag = 'scoped memory for tpu_custom_call.1']
    #allocation8 [shape = 'u8[1024]{0}', space=vmem, size = 0x400, scoped, tag = 'input window, operand 1']
    #allocation9 [shape = 'u8[512]{0}', space=smem, size = 0x200, scoped, tag = 'input window, operand 3, single buffered']
    #allocation10 [shape = 's32[1]{0}', space=sflag, size = 0x4, scoped, tag = 'scoped memory for tpu_custom_call.1']
    #allocation11 [shape = 'u8[4096]{0}', space=vmem, size = 0x1000, scoped, tag = 'output window, operand 1, single buffered']
    #allocation12 [shape = 'u8[4096]{0}', space=vmem, size = 0x1000, scoped, tag = 'output window, operand 2, single buffered']
    #allocation13 [shape = 's32[1]{0}', space=sflag, size = 0x4, scoped, tag = 'scoped memory for tpu_custom_call.1']
    %13 = vsyncpa [#allocation7], 0
    %14 = vsyncpa [#allocation5], 0
    %s15 = scalar_lea.sflag [#allocation5], 1
    %16 = vsyncpa %s15, 0
    %17 = vsyncpa [#allocation10], 0
    %18 = vsyncpa [#allocation6], 0
    %19 = vsyncpa [#allocation13], 0
    loop: start=0, step=1, limit=6
    $region2: #{tpu_custom_call.1} parent=1 // loop_pre_header
      _
    $region3: #{tpu_custom_call.1} parent=1 // loop_header
      %s21 = sphi 0, %s25
      %p22 = scmp.ge.s32.totalorder %s21, 6
      %s29 = sphi 0, %s29
      %s31 = sphi 0, %s29
      %s32 = sphi 0, %s31
      %s46 = sphi 0, %s32
      %s52 = sphi 0, %s54
      %s55 = sphi 0, %s52
      %s56 = sphi 0, %s55
      %s72 = sphi 0, %s56
      %s76 = sphi 0, %s76
      %s78 = sphi 0, %s76
      %s79 = sphi 0, %s78
      %s93 = sphi 0, %s79
      %s97 = sphi 0, %s97
      %s99 = sphi 0, %s97
      %s100 = sphi 0, %s99
      %s114 = sphi 0, %s100
      %s120 = sphi 0, %s122
      %s123 = sphi 0, %s120
      %s124 = sphi 0, %s123
      %s140 = sphi 0, %s124
      %s144 = sphi 0, %s144
      %s146 = sphi 0, %s144
      %s147 = sphi 0, %s146
      %s161 = sphi 0, %s147
      %s165 = sphi 0, %s165
      %s167 = sphi 0, %s165
      %s168 = sphi 0, %s167
      %s182 = sphi 0, %s168
      %s188 = sphi 0, %s190
      %s191 = sphi 0, %s188
      %s192 = sphi 0, %s191
      %s208 = sphi 0, %s192
    $region4: #{tpu_custom_call.1} parent=1 // loop_header_branch
      %24 = sbr.rel (%p22) target = $region8
    $region5: #{tpu_custom_call.1} parent=1 // loop_body
      %s26 = ssub.s32 %s21, 1
      %s27 = ssub.s32 %s21, 2
      %s28 = sadd.s32 %s21, 1
      %s30 = sadd.s32 %s29, 1
      %p33 = scmp.eq.s32.totalorder %s21, 3
      %p34 = scmp.ne.s32.totalorder %s29, %s31
      %p35 = scmp.eq.s32.totalorder %s21, 0
      %p36 = por %p34, %p35
      %p37 = scmp.ne.s32.totalorder %s29, %s31
      %p38 = scmp.eq.s32.totalorder %s26, 3
      %p39 = por %p37, %p38
      %p40 = scmp.ne.s32.totalorder %s31, %s32
      %p41 = scmp.eq.s32.totalorder %s26, 0
      %p42 = por %p40, %p41
      %p43 = scmp.ne.s32.totalorder %s31, %s32
      %p44 = scmp.eq.s32.totalorder %s27, 3
      %p45 = por %p43, %p44
      %p47 = scmp.ne.s32.totalorder %s32, %s46
      %p48 = scmp.eq.s32.totalorder %s27, 0
      %p49 = por %p47, %p48
      %s50 = ssub.s32 %s21, %s28
      %p51 = scmp.eq.s32.totalorder %s50, 0
      %s53 = sadd.s32 %s52, 1
      %s54 = scalar_select %p51, %s52, %s53
      %p57 = pneg %p51
      %p58 = scmp.eq.s32.totalorder %s21, 3
      %p59 = por %p57, %p58
      %p60 = scmp.ne.s32.totalorder %s52, %s55
      %p61 = scmp.eq.s32.totalorder %s21, 0
      %p62 = por %p60, %p61
      %p63 = scmp.ne.s32.totalorder %s52, %s55
      %p64 = scmp.eq.s32.totalorder %s26, 3
      %p65 = por %p63, %p64
      %p66 = scmp.ne.s32.totalorder %s55, %s56
      %p67 = scmp.eq.s32.totalorder %s26, 0
      %p68 = por %p66, %p67
      %p69 = scmp.ne.s32.totalorder %s55, %s56
      %p70 = scmp.eq.s32.totalorder %s27, 3
      %p71 = por %p69, %p70
      %p73 = scmp.ne.s32.totalorder %s56, %s72
      %p74 = scmp.eq.s32.totalorder %s27, 0
      %p75 = por %p73, %p74
      %s77 = sadd.s32 %s76, 1
      %p80 = scmp.eq.s32.totalorder %s21, 3
      %p81 = scmp.ne.s32.totalorder %s76, %s78
      %p82 = scmp.eq.s32.totalorder %s21, 0
      %p83 = por %p81, %p82
      %p84 = scmp.ne.s32.totalorder %s76, %s78
      %p85 = scmp.eq.s32.totalorder %s26, 3
      %p86 = por %p84, %p85
      %p87 = scmp.ne.s32.totalorder %s78, %s79
      %p88 = scmp.eq.s32.totalorder %s26, 0
      %p89 = por %p87, %p88
      %p90 = scmp.ne.s32.totalorder %s78, %s79
      %p91 = scmp.eq.s32.totalorder %s27, 3
      %p92 = por %p90, %p91
      %p94 = scmp.ne.s32.totalorder %s79, %s93
      %p95 = scmp.eq.s32.totalorder %s27, 0
      %p96 = por %p94, %p95
      %s98 = sadd.s32 %s97, 1
      %p101 = scmp.eq.s32.totalorder %s21, 3
      %p102 = scmp.ne.s32.totalorder %s97, %s99
      %p103 = scmp.eq.s32.totalorder %s21, 0
      %p104 = por %p102, %p103
      %p105 = scmp.ne.s32.totalorder %s97, %s99
      %p106 = scmp.eq.s32.totalorder %s26, 3
      %p107 = por %p105, %p106
      %p108 = scmp.ne.s32.totalorder %s99, %s100
      %p109 = scmp.eq.s32.totalorder %s26, 0
      %p110 = por %p108, %p109
      %p111 = scmp.ne.s32.totalorder %s99, %s100
      %p112 = scmp.eq.s32.totalorder %s27, 3
      %p113 = por %p111, %p112
      %p115 = scmp.ne.s32.totalorder %s100, %s114
      %p116 = scmp.eq.s32.totalorder %s27, 0
      %p117 = por %p115, %p116
      %s118 = ssub.s32 %s21, %s28
      %p119 = scmp.eq.s32.totalorder %s118, 0
      %s121 = sadd.s32 %s120, 1
      %s122 = scalar_select %p119, %s120, %s121
      %p125 = pneg %p119
      %p126 = scmp.eq.s32.totalorder %s21, 3
      %p127 = por %p125, %p126
      %p128 = scmp.ne.s32.totalorder %s120, %s123
      %p129 = scmp.eq.s32.totalorder %s21, 0
      %p130 = por %p128, %p129
      %p131 = scmp.ne.s32.totalorder %s120, %s123
      %p132 = scmp.eq.s32.totalorder %s26, 3
      %p133 = por %p131, %p132
      %p134 = scmp.ne.s32.totalorder %s123, %s124
      %p135 = scmp.eq.s32.totalorder %s26, 0
      %p136 = por %p134, %p135
      %p137 = scmp.ne.s32.totalorder %s123, %s124
      %p138 = scmp.eq.s32.totalorder %s27, 3
      %p139 = por %p137, %p138
      %p141 = scmp.ne.s32.totalorder %s124, %s140
      %p142 = scmp.eq.s32.totalorder %s27, 0
      %p143 = por %p141, %p142
      %s145 = sadd.s32 %s144, 1
      %p148 = scmp.eq.s32.totalorder %s21, 3
      %p149 = scmp.ne.s32.totalorder %s144, %s146
      %p150 = scmp.eq.s32.totalorder %s21, 0
      %p151 = por %p149, %p150
      %p152 = scmp.ne.s32.totalorder %s144, %s146
      %p153 = scmp.eq.s32.totalorder %s26, 3
      %p154 = por %p152, %p153
      %p155 = scmp.ne.s32.totalorder %s146, %s147
      %p156 = scmp.eq.s32.totalorder %s26, 0
      %p157 = por %p155, %p156
      %p158 = scmp.ne.s32.totalorder %s146, %s147
      %p159 = scmp.eq.s32.totalorder %s27, 3
      %p160 = por %p158, %p159
      %p162 = scmp.ne.s32.totalorder %s147, %s161
      %p163 = scmp.eq.s32.totalorder %s27, 0
      %p164 = por %p162, %p163
      %s166 = sadd.s32 %s165, 1
      %p169 = scmp.eq.s32.totalorder %s21, 3
      %p170 = scmp.ne.s32.totalorder %s165, %s167
      %p171 = scmp.eq.s32.totalorder %s21, 0
      %p172 = por %p170, %p171
      %p173 = scmp.ne.s32.totalorder %s165, %s167
      %p174 = scmp.eq.s32.totalorder %s26, 3
      %p175 = por %p173, %p174
      %p176 = scmp.ne.s32.totalorder %s167, %s168
      %p177 = scmp.eq.s32.totalorder %s26, 0
      %p178 = por %p176, %p177
      %p179 = scmp.ne.s32.totalorder %s167, %s168
      %p180 = scmp.eq.s32.totalorder %s27, 3
      %p181 = por %p179, %p180
      %p183 = scmp.ne.s32.totalorder %s168, %s182
      %p184 = scmp.eq.s32.totalorder %s27, 0
      %p185 = por %p183, %p184
      %s186 = ssub.s32 %s21, %s28
      %p187 = scmp.eq.s32.totalorder %s186, 0
      %s189 = sadd.s32 %s188, 1
      %s190 = scalar_select %p187, %s188, %s189
      %p193 = pneg %p187
      %p194 = scmp.eq.s32.totalorder %s21, 3
      %p195 = por %p193, %p194
      %p196 = scmp.ne.s32.totalorder %s188, %s191
      %p197 = scmp.eq.s32.totalorder %s21, 0
      %p198 = por %p196, %p197
      %p199 = scmp.ne.s32.totalorder %s188, %s191
      %p200 = scmp.eq.s32.totalorder %s26, 3
      %p201 = por %p199, %p200
      %p202 = scmp.ne.s32.totalorder %s191, %s192
      %p203 = scmp.eq.s32.totalorder %s26, 0
      %p204 = por %p202, %p203
      %p205 = scmp.ne.s32.totalorder %s191, %s192
      %p206 = scmp.eq.s32.totalorder %s27, 3
      %p207 = por %p205, %p206
      %p209 = scmp.ne.s32.totalorder %s192, %s208
      %p210 = scmp.eq.s32.totalorder %s27, 0
      %p211 = por %p209, %p210
      %p212 = scmp.le.s32.totalorder 1, %s21
      %p213 = scmp.lt.s32.totalorder %s21, 5
      %p214 = pnand %p212, %p213
      %p215 = pneg %p214
      // Predicated region
      $region9: #{tpu_custom_call.1} parent=5 // pred_check
        _
      $region10: #{tpu_custom_call.1} parent=5 // pred_check_branch
        %217 = sbr.rel (%p214) target = $region12
      $region11: #{tpu_custom_call.1} parent=5 // pred_region
        %s218 = ssub.s32 %s21, 1
        // Predicated region
        $region13: #{tpu_custom_call.1} parent=11 // pred_check
          %p219 = pneg %p42
        $region14: #{tpu_custom_call.1} parent=11 // pred_check_branch
          %221 = sbr.rel (%p219) target = $region16
        $region15: #{tpu_custom_call.1} parent=11 // pred_region
          %s223 = ssub.s32 64, 64
          %224 = vsyncadd [#allocation7], %s223
          %s226 = sshll.u32 %s0, 4
          %s227 = int_to_ptr.vmem [resolvable:$true] %s226
          %229 = dma.vmem_to_smem %s227, 64, [#allocation4], [#allocation7]
        $region16: #{tpu_custom_call.1} parent=11 // pred_fallthru
          _
        // Predicated region
        $region17: #{tpu_custom_call.1} parent=11 // pred_check
          %p230 = pneg %p89
        $region18: #{tpu_custom_call.1} parent=11 // pred_check_branch
          %232 = sbr.rel (%p230) target = $region20
        $region19: #{tpu_custom_call.1} parent=11 // pred_region
          _
        $region20: #{tpu_custom_call.1} parent=11 // pred_fallthru
          _
        // Predicated region
        $region21: #{tpu_custom_call.1} parent=11 // pred_check
          %p233 = pneg %p110
        $region22: #{tpu_custom_call.1} parent=11 // pred_check_branch
          %235 = sbr.rel (%p233) target = $region24
        $region23: #{tpu_custom_call.1} parent=11 // pred_region
          %s237 = ssub.s32 16, 16
          %238 = vsyncadd [#allocation10], %s237
          %s240 = sshll.u32 %s3, 4
          %s241 = int_to_ptr.vmem [resolvable:$true] %s240
          %243 = dma.vmem_to_smem %s241, 16, [#allocation9], [#allocation10]
        $region24: #{tpu_custom_call.1} parent=11 // pred_fallthru
          _
      $region12: #{tpu_custom_call.1} parent=5 // pred_fallthru
        _
      %p244 = scmp.lt.s32.totalorder %s21, 4
      // Predicated region
      $region25: #{tpu_custom_call.1} parent=5 // pred_check
        %p245 = pneg %p244
      $region26: #{tpu_custom_call.1} parent=5 // pred_check_branch
        %247 = sbr.rel (%p245) target = $region28
      $region27: #{tpu_custom_call.1} parent=5 // pred_region
        // Predicated region
        $region29: #{tpu_custom_call.1} parent=27 // pred_check
          %p248 = pneg %p62
        $region30: #{tpu_custom_call.1} parent=27 // pred_check_branch
          %250 = sbr.rel (%p248) target = $region32
        $region31: #{tpu_custom_call.1} parent=27 // pred_region
          %s251 = sand.u32 %s52, 1
          %s252 = scalar_lea.sflag [#allocation5], %s251
          %s253 = sand.u32 %s52, 1
          %s254 = scalar_lea.vmem [#allocation8], %s253
          %s256 = ssub.s32 16, 16
          %257 = vsyncadd %s252, %s256
          %s258 = smul.addr %s21, 16
          %s259 = scalar_lea.hbm %s1, %s258
          %s261 = sshll.u32 %s254, 4
          %s262 = int_to_ptr.vmem [resolvable:$true] %s261
          %264 = dma.hbm_to_vmem [thread:$0]  %s259, 16, %s262, %s252
        $region32: #{tpu_custom_call.1} parent=27 // pred_fallthru
          _
      $region28: #{tpu_custom_call.1} parent=5 // pred_fallthru
        _
      %p265 = scmp.le.s32.totalorder 1, %s21
      %p266 = scmp.lt.s32.totalorder %s21, 5
      %p267 = pnand %p265, %p266
      %p268 = pneg %p267
      // Predicated region
      $region33: #{tpu_custom_call.1} parent=5 // pred_check
        _
      $region34: #{tpu_custom_call.1} parent=5 // pred_check_branch
        %270 = sbr.rel (%p267) target = $region36
      $region35: #{tpu_custom_call.1} parent=5 // pred_region
        %s271 = ssub.s32 %s21, 1
        // Predicated region
        $region37: #{tpu_custom_call.1} parent=35 // pred_check
          %p272 = pneg %p42
        $region38: #{tpu_custom_call.1} parent=35 // pred_check_branch
          %274 = sbr.rel (%p272) target = $region40
        $region39: #{tpu_custom_call.1} parent=35 // pred_region
          %275 = dma.done [#allocation7], 64
        $region40: #{tpu_custom_call.1} parent=35 // pred_fallthru
          _
        %s276 = sand.u32 %s55, 1
        %s277 = scalar_lea.sflag [#allocation5], %s276
        %s278 = sand.u32 %s55, 1
        %s279 = scalar_lea.vmem [#allocation8], %s278
        // Predicated region
        $region41: #{tpu_custom_call.1} parent=35 // pred_check
          %p280 = pneg %p68
        $region42: #{tpu_custom_call.1} parent=35 // pred_check_branch
          %282 = sbr.rel (%p280) target = $region44
        $region43: #{tpu_custom_call.1} parent=35 // pred_region
          %283 = dma.done %s277, 16
        $region44: #{tpu_custom_call.1} parent=35 // pred_fallthru
          _
        // Predicated region
        $region45: #{tpu_custom_call.1} parent=35 // pred_check
          %p284 = pneg %p110
        $region46: #{tpu_custom_call.1} parent=35 // pred_check_branch
          %286 = sbr.rel (%p284) target = $region48
        $region47: #{tpu_custom_call.1} parent=35 // pred_region
          %287 = dma.done [#allocation10], 16
        $region48: #{tpu_custom_call.1} parent=35 // pred_fallthru
          _
        %288 = sfence
        %p289 = pneg %p42
        %p290 = pneg %p39
        %s291 = sand.u32 %s55, 1
        %s292 = scalar_lea.sflag [#allocation5], %s291
        %s293 = sand.u32 %s55, 1
        %s294 = scalar_lea.vmem [#allocation8], %s293
        %p295 = pneg %p68
        %p296 = pneg %p65
        %p297 = pneg %p89
        %p298 = pneg %p86
        %p299 = pneg %p110
        %p300 = pneg %p107
        %p301 = pneg %p136
        %p302 = pneg %p133
        %p303 = scmp.lt.s32.totalorder %s26, 3
        %s304 = scalar_select %p303, %s26, 3
        %s305 = smul.addr %s304, 8
        %s306 = scalar_lea.vmem %s4, %s305
        %p307 = pneg %p157
        %p308 = pneg %p154
        %p309 = pneg %p178
        %p310 = pneg %p175
        %p311 = pneg %p204
        %p312 = pneg %p201
        %p313 = scmp.lt.s32.totalorder %s26, 3
        %s314 = scalar_select %p313, %s26, 3
        %s315 = smul.addr %s314, 8
        %s316 = scalar_lea.vmem %s7, %s315
        %p317 = scmp.lt.s32.totalorder %s26, 3
        %s318 = scalar_select %p317, %s26, 3
        %s319 = smul.addr %s318, 8
        %s320 = scalar_lea.vmem %s4, %s319
        %p321 = scmp.lt.s32.totalorder %s26, 3
        %s322 = scalar_select %p321, %s26, 3
        %s323 = smul.addr %s322, 8
        %s324 = scalar_lea.vmem %s7, %s323
        %p325 = scmp.eq.s32.totalorder %s26, 0
        // Predicated region
        $region49: #{tpu_custom_call.1} parent=35 // pred_check
          %p326 = pneg %p325
        $region50: #{tpu_custom_call.1} parent=35 // pred_check_branch
          %328 = sbr.rel (%p326) target = $region52
        $region51: #{tpu_custom_call.1} parent=35 // pred_region
          %v329 = vld [vmem:[%s2] sm:$0xff]
          %330 = vst [vmem:[#allocation11] sm:$0xff] %v329
          %s331 = sld [smem:[#allocation9]]
          %s332 = smul.f32 %s331, %s331
          %s333 = scalar_lea.smem [#allocation2], 0
          %334 = sst [smem:[%s333]] %s332
          %v335 = vstv %s331
          %v336 = vrcp.pop %v335
          %s337 = vtos %v336
          %s338 = scalar_lea.smem [#allocation3], 0
          %339 = sst [smem:[%s338]] %s337
          %s340 = sld [smem:[#allocation9 + $0x1]]
          %s341 = smul.f32 %s340, %s340
          %s342 = scalar_lea.smem [#allocation2], 1
          %343 = sst [smem:[%s342]] %s341
          %v344 = vstv %s340
          %v345 = vrcp.pop %v344
          %s346 = vtos %v345
          %s347 = scalar_lea.smem [#allocation3], 1
          %348 = sst [smem:[%s347]] %s346
          %s349 = sld [smem:[#allocation9 + $0x2]]
          %s350 = smul.f32 %s349, %s349
          %s351 = scalar_lea.smem [#allocation2], 2
          %352 = sst [smem:[%s351]] %s350
          %v353 = vstv %s349
          %v354 = vrcp.pop %v353
          %s355 = vtos %v354
          %s356 = scalar_lea.smem [#allocation3], 2
          %357 = sst [smem:[%s356]] %s355
          %s358 = sld [smem:[#allocation9 + $0x3]]
          %s359 = smul.f32 %s358, %s358
          %s360 = scalar_lea.smem [#allocation2], 3
          %361 = sst [smem:[%s360]] %s359
          %v362 = vstv %s358
          %v363 = vrcp.pop %v362
          %s364 = vtos %v363
          %s365 = scalar_lea.smem [#allocation3], 3
          %366 = sst [smem:[%s365]] %s364
          %s367 = sld [smem:[#allocation9 + $0x4]]
          %s368 = smul.f32 %s367, %s367
          %s369 = scalar_lea.smem [#allocation2], 4
          %370 = sst [smem:[%s369]] %s368
          %v371 = vstv %s367
          %v372 = vrcp.pop %v371
          %s373 = vtos %v372
          %s374 = scalar_lea.smem [#allocation3], 4
          %375 = sst [smem:[%s374]] %s373
          %s376 = sld [smem:[#allocation9 + $0x5]]
          %s377 = smul.f32 %s376, %s376
          %s378 = scalar_lea.smem [#allocation2], 5
          %379 = sst [smem:[%s378]] %s377
          %v380 = vstv %s376
          %v381 = vrcp.pop %v380
          %s382 = vtos %v381
          %s383 = scalar_lea.smem [#allocation3], 5
          %384 = sst [smem:[%s383]] %s382
          %s385 = sld [smem:[#allocation9 + $0x6]]
          %s386 = smul.f32 %s385, %s385
          %s387 = scalar_lea.smem [#allocation2], 6
          %388 = sst [smem:[%s387]] %s386
          %v389 = vstv %s385
          %v390 = vrcp.pop %v389
          %s391 = vtos %v390
          %s392 = scalar_lea.smem [#allocation3], 6
          %393 = sst [smem:[%s392]] %s391
          %s394 = sld [smem:[#allocation9 + $0x7]]
          %s395 = smul.f32 %s394, %s394
          %s396 = scalar_lea.smem [#allocation2], 7
          %397 = sst [smem:[%s396]] %s395
          %v398 = vstv %s394
          %v399 = vrcp.pop %v398
          %s400 = vtos %v399
          %s401 = scalar_lea.smem [#allocation3], 7
          %402 = sst [smem:[%s401]] %s400
        $region52: #{tpu_custom_call.1} parent=35 // pred_fallthru
          _
        %s403 = smul.u32 %s26, 128
        %s404 = sld [smem:[#allocation4 + %s403]]
        %s405 = sadd.s32 %s403, 1
        %s406 = sld [smem:[#allocation4 + %s405]]
        %s407 = smul.f32 %s404, %s404
        %s408 = smul.f32 %s404, 2.0
        %v409 = vld [vmem:[%s279] sm:$0x1]
        %v410 = vmul.f32 %v409, %v409
        %vm411 = vcmask 1040384
        %v412 = vsel %vm411, %v410, 0.0
        %413 = vadd.xlane.f32.xlu0 %v412
        %v414 = vpop.xlane.xlu0 %413
        %v415 = vrot.slane %v414, 4
        %v416 = vadd.f32 %v414, %v415
        %v417 = vrot.slane %v416, 2
        %v418 = vadd.f32 %v416, %v417
        %v419 = vrot.slane %v418, 1
        %v420 = vadd.f32 %v418, %v419
        %s421 = vtos %v420
        %v422 = vld [vmem:[#allocation11] sm:$0x1]
        %s423 = sld [smem:[#allocation2]]
        %s424 = sld [smem:[#allocation3]]
        %v425 = vmul.f32 %v409, %v422
        %v426 = vsel %vm411, %v425, 0.0
        %427 = vadd.xlane.f32.xlu0 %v426
        %v428 = vpop.xlane.xlu0 %427
        %v429 = vrot.slane %v428, 4
        %v430 = vadd.f32 %v428, %v429
        %v431 = vrot.slane %v430, 2
        %v432 = vadd.f32 %v430, %v431
        %v433 = vrot.slane %v432, 1
        %v434 = vadd.f32 %v432, %v433
        %s435 = vtos %v434
        %s436 = smul.f32 %s406, %s435
        %s437 = smul.f32 %s436, %s424
        %v438 = vstv %s404
        %v439 = vmul.f32 %v438, %v422
        %v440 = vstv %s437
        %v441 = vmul.f32 %v440, %v409
        %v442 = vadd.f32 %v439, %v441
        %s443 = smul.f32 %s407, %s423
        %s444 = smul.f32 %s408, %s437
        %s445 = smul.f32 %s444, %s435
        %s446 = sadd.f32 %s443, %s445
        %s447 = smul.f32 %s437, %s437
        %s448 = smul.f32 %s447, %s421
        %s449 = sadd.f32 %s446, %s448
        %v450 = vstv %s449
        %v451 = vrsqrt.pop %v450
        %s452 = vtos %v451
        %s453 = smul.f32 %s404, %s435
        %s454 = smul.f32 %s437, %s421
        %s455 = sadd.f32 %s453, %s454
        %s456 = smul.f32 %s455, %s452
        %457 = vst [vmem:[#allocation11] sm:$0x1] %v442
        %v458 = vstv %s452
        %v459 = vmul.f32 %v442, %v458
        %460 = vst [vmem:[#allocation12] sm:$0x1] %v459
        %s461 = scalar_lea.smem [#allocation2], 0
        %462 = sst [smem:[%s461]] %s449
        %s463 = scalar_lea.smem [#allocation3], 0
        %464 = sst [smem:[%s463]] %s452
        %s465 = smul.f32 %s456, %s452
        %v466 = vstv %s465
        %v467 = vmul.f32 %v466, %v442
        %v468 = vsub.f32 %v409, %v467
        %s469 = smul.f32 %s456, %s456
        %s470 = ssub.f32 %s421, %s469
        %v471 = vld [vmem:[#allocation11 + $0x1] sm:$0x1]
        %s472 = sld [smem:[#allocation2 + $0x1]]
        %s473 = sld [smem:[#allocation3 + $0x1]]
        %v474 = vmul.f32 %v468, %v471
        %v475 = vsel %vm411, %v474, 0.0
        %476 = vadd.xlane.f32.xlu0 %v475
        %v477 = vpop.xlane.xlu0 %476
        %v478 = vrot.slane %v477, 4
        %v479 = vadd.f32 %v477, %v478
        %v480 = vrot.slane %v479, 2
        %v481 = vadd.f32 %v479, %v480
        %v482 = vrot.slane %v481, 1
        %v483 = vadd.f32 %v481, %v482
        %s484 = vtos %v483
        %s485 = smul.f32 %s406, %s484
        %s486 = smul.f32 %s485, %s473
        %v487 = vmul.f32 %v438, %v471
        %v488 = vstv %s486
        %v489 = vmul.f32 %v488, %v468
        %v490 = vadd.f32 %v487, %v489
        %s491 = smul.f32 %s407, %s472
        %s492 = smul.f32 %s408, %s486
        %s493 = smul.f32 %s492, %s484
        %s494 = sadd.f32 %s491, %s493
        %s495 = smul.f32 %s486, %s486
        %s496 = smul.f32 %s495, %s470
        %s497 = sadd.f32 %s494, %s496
        %v498 = vstv %s497
        %v499 = vrsqrt.pop %v498
        %s500 = vtos %v499
        %s501 = smul.f32 %s404, %s484
        %s502 = smul.f32 %s486, %s470
        %s503 = sadd.f32 %s501, %s502
        %s504 = smul.f32 %s503, %s500
        %505 = vst [vmem:[#allocation11 + $0x1] sm:$0x1] %v490
        %v506 = vstv %s500
        %v507 = vmul.f32 %v490, %v506
        %508 = vst [vmem:[#allocation12 + $0x1] sm:$0x1] %v507
        %s509 = scalar_lea.smem [#allocation2], 1
        %510 = sst [smem:[%s509]] %s497
        %s511 = scalar_lea.smem [#allocation3], 1
        %512 = sst [smem:[%s511]] %s500
        %s513 = smul.f32 %s504, %s500
        %v514 = vstv %s513
        %v515 = vmul.f32 %v514, %v490
        %v516 = vsub.f32 %v468, %v515
        %s517 = smul.f32 %s504, %s504
        %s518 = ssub.f32 %s470, %s517
        %v519 = vld [vmem:[#allocation11 + $0x2] sm:$0x1]
        %s520 = sld [smem:[#allocation2 + $0x2]]
        %s521 = sld [smem:[#allocation3 + $0x2]]
        %v522 = vmul.f32 %v516, %v519
        %v523 = vsel %vm411, %v522, 0.0
        %524 = vadd.xlane.f32.xlu0 %v523
        %v525 = vpop.xlane.xlu0 %524
        %v526 = vrot.slane %v525, 4
        %v527 = vadd.f32 %v525, %v526
        %v528 = vrot.slane %v527, 2
        %v529 = vadd.f32 %v527, %v528
        %v530 = vrot.slane %v529, 1
        %v531 = vadd.f32 %v529, %v530
        %s532 = vtos %v531
        %s533 = smul.f32 %s406, %s532
        %s534 = smul.f32 %s533, %s521
        %v535 = vmul.f32 %v438, %v519
        %v536 = vstv %s534
        %v537 = vmul.f32 %v536, %v516
        %v538 = vadd.f32 %v535, %v537
        %s539 = smul.f32 %s407, %s520
        %s540 = smul.f32 %s408, %s534
        %s541 = smul.f32 %s540, %s532
        %s542 = sadd.f32 %s539, %s541
        %s543 = smul.f32 %s534, %s534
        %s544 = smul.f32 %s543, %s518
        %s545 = sadd.f32 %s542, %s544
        %v546 = vstv %s545
        %v547 = vrsqrt.pop %v546
        %s548 = vtos %v547
        %s549 = smul.f32 %s404, %s532
        %s550 = smul.f32 %s534, %s518
        %s551 = sadd.f32 %s549, %s550
        %s552 = smul.f32 %s551, %s548
        %553 = vst [vmem:[#allocation11 + $0x2] sm:$0x1] %v538
        %v554 = vstv %s548
        %v555 = vmul.f32 %v538, %v554
        %556 = vst [vmem:[#allocation12 + $0x2] sm:$0x1] %v555
        %s557 = scalar_lea.smem [#allocation2], 2
        %558 = sst [smem:[%s557]] %s545
        %s559 = scalar_lea.smem [#allocation3], 2
        %560 = sst [smem:[%s559]] %s548
        %s561 = smul.f32 %s552, %s548
        %v562 = vstv %s561
        %v563 = vmul.f32 %v562, %v538
        %v564 = vsub.f32 %v516, %v563
        %s565 = smul.f32 %s552, %s552
        %s566 = ssub.f32 %s518, %s565
        %v567 = vld [vmem:[#allocation11 + $0x3] sm:$0x1]
        %s568 = sld [smem:[#allocation2 + $0x3]]
        %s569 = sld [smem:[#allocation3 + $0x3]]
        %v570 = vmul.f32 %v564, %v567
        %v571 = vsel %vm411, %v570, 0.0
        %572 = vadd.xlane.f32.xlu0 %v571
        %v573 = vpop.xlane.xlu0 %572
        %v574 = vrot.slane %v573, 4
        %v575 = vadd.f32 %v573, %v574
        %v576 = vrot.slane %v575, 2
        %v577 = vadd.f32 %v575, %v576
        %v578 = vrot.slane %v577, 1
        %v579 = vadd.f32 %v577, %v578
        %s580 = vtos %v579
        %s581 = smul.f32 %s406, %s580
        %s582 = smul.f32 %s581, %s569
        %v583 = vmul.f32 %v438, %v567
        %v584 = vstv %s582
        %v585 = vmul.f32 %v584, %v564
        %v586 = vadd.f32 %v583, %v585
        %s587 = smul.f32 %s407, %s568
        %s588 = smul.f32 %s408, %s582
        %s589 = smul.f32 %s588, %s580
        %s590 = sadd.f32 %s587, %s589
        %s591 = smul.f32 %s582, %s582
        %s592 = smul.f32 %s591, %s566
        %s593 = sadd.f32 %s590, %s592
        %v594 = vstv %s593
        %v595 = vrsqrt.pop %v594
        %s596 = vtos %v595
        %s597 = smul.f32 %s404, %s580
        %s598 = smul.f32 %s582, %s566
        %s599 = sadd.f32 %s597, %s598
        %s600 = smul.f32 %s599, %s596
        %601 = vst [vmem:[#allocation11 + $0x3] sm:$0x1] %v586
        %v602 = vstv %s596
        %v603 = vmul.f32 %v586, %v602
        %604 = vst [vmem:[#allocation12 + $0x3] sm:$0x1] %v603
        %s605 = scalar_lea.smem [#allocation2], 3
        %606 = sst [smem:[%s605]] %s593
        %s607 = scalar_lea.smem [#allocation3], 3
        %608 = sst [smem:[%s607]] %s596
        %s609 = smul.f32 %s600, %s596
        %v610 = vstv %s609
        %v611 = vmul.f32 %v610, %v586
        %v612 = vsub.f32 %v564, %v611
        %s613 = smul.f32 %s600, %s600
        %s614 = ssub.f32 %s566, %s613
        %v615 = vld [vmem:[#allocation11 + $0x4] sm:$0x1]
        %s616 = sld [smem:[#allocation2 + $0x4]]
        %s617 = sld [smem:[#allocation3 + $0x4]]
        %v618 = vmul.f32 %v612, %v615
        %v619 = vsel %vm411, %v618, 0.0
        %620 = vadd.xlane.f32.xlu0 %v619
        %v621 = vpop.xlane.xlu0 %620
        %v622 = vrot.slane %v621, 4
        %v623 = vadd.f32 %v621, %v622
        %v624 = vrot.slane %v623, 2
        %v625 = vadd.f32 %v623, %v624
        %v626 = vrot.slane %v625, 1
        %v627 = vadd.f32 %v625, %v626
        %s628 = vtos %v627
        %s629 = smul.f32 %s406, %s628
        %s630 = smul.f32 %s629, %s617
        %v631 = vmul.f32 %v438, %v615
        %v632 = vstv %s630
        %v633 = vmul.f32 %v632, %v612
        %v634 = vadd.f32 %v631, %v633
        %s635 = smul.f32 %s407, %s616
        %s636 = smul.f32 %s408, %s630
        %s637 = smul.f32 %s636, %s628
        %s638 = sadd.f32 %s635, %s637
        %s639 = smul.f32 %s630, %s630
        %s640 = smul.f32 %s639, %s614
        %s641 = sadd.f32 %s638, %s640
        %v642 = vstv %s641
        %v643 = vrsqrt.pop %v642
        %s644 = vtos %v643
        %s645 = smul.f32 %s404, %s628
        %s646 = smul.f32 %s630, %s614
        %s647 = sadd.f32 %s645, %s646
        %s648 = smul.f32 %s647, %s644
        %649 = vst [vmem:[#allocation11 + $0x4] sm:$0x1] %v634
        %v650 = vstv %s644
        %v651 = vmul.f32 %v634, %v650
        %652 = vst [vmem:[#allocation12 + $0x4] sm:$0x1] %v651
        %s653 = scalar_lea.smem [#allocation2], 4
        %654 = sst [smem:[%s653]] %s641
        %s655 = scalar_lea.smem [#allocation3], 4
        %656 = sst [smem:[%s655]] %s644
        %s657 = smul.f32 %s648, %s644
        %v658 = vstv %s657
        %v659 = vmul.f32 %v658, %v634
        %v660 = vsub.f32 %v612, %v659
        %s661 = smul.f32 %s648, %s648
        %s662 = ssub.f32 %s614, %s661
        %v663 = vld [vmem:[#allocation11 + $0x5] sm:$0x1]
        %s664 = sld [smem:[#allocation2 + $0x5]]
        %s665 = sld [smem:[#allocation3 + $0x5]]
        %v666 = vmul.f32 %v660, %v663
        %v667 = vsel %vm411, %v666, 0.0
        %668 = vadd.xlane.f32.xlu0 %v667
        %v669 = vpop.xlane.xlu0 %668
        %v670 = vrot.slane %v669, 4
        %v671 = vadd.f32 %v669, %v670
        %v672 = vrot.slane %v671, 2
        %v673 = vadd.f32 %v671, %v672
        %v674 = vrot.slane %v673, 1
        %v675 = vadd.f32 %v673, %v674
        %s676 = vtos %v675
        %s677 = smul.f32 %s406, %s676
        %s678 = smul.f32 %s677, %s665
        %v679 = vmul.f32 %v438, %v663
        %v680 = vstv %s678
        %v681 = vmul.f32 %v680, %v660
        %v682 = vadd.f32 %v679, %v681
        %s683 = smul.f32 %s407, %s664
        %s684 = smul.f32 %s408, %s678
        %s685 = smul.f32 %s684, %s676
        %s686 = sadd.f32 %s683, %s685
        %s687 = smul.f32 %s678, %s678
        %s688 = smul.f32 %s687, %s662
        %s689 = sadd.f32 %s686, %s688
        %v690 = vstv %s689
        %v691 = vrsqrt.pop %v690
        %s692 = vtos %v691
        %s693 = smul.f32 %s404, %s676
        %s694 = smul.f32 %s678, %s662
        %s695 = sadd.f32 %s693, %s694
        %s696 = smul.f32 %s695, %s692
        %697 = vst [vmem:[#allocation11 + $0x5] sm:$0x1] %v682
        %v698 = vstv %s692
        %v699 = vmul.f32 %v682, %v698
        %700 = vst [vmem:[#allocation12 + $0x5] sm:$0x1] %v699
        %s701 = scalar_lea.smem [#allocation2], 5
        %702 = sst [smem:[%s701]] %s689
        %s703 = scalar_lea.smem [#allocation3], 5
        %704 = sst [smem:[%s703]] %s692
        %s705 = smul.f32 %s696, %s692
        %v706 = vstv %s705
        %v707 = vmul.f32 %v706, %v682
        %v708 = vsub.f32 %v660, %v707
        %s709 = smul.f32 %s696, %s696
        %s710 = ssub.f32 %s662, %s709
        %v711 = vld [vmem:[#allocation11 + $0x6] sm:$0x1]
        %s712 = sld [smem:[#allocation2 + $0x6]]
        %s713 = sld [smem:[#allocation3 + $0x6]]
        %v714 = vmul.f32 %v708, %v711
        %v715 = vsel %vm411, %v714, 0.0
        %716 = vadd.xlane.f32.xlu0 %v715
        %v717 = vpop.xlane.xlu0 %716
        %v718 = vrot.slane %v717, 4
        %v719 = vadd.f32 %v717, %v718
        %v720 = vrot.slane %v719, 2
        %v721 = vadd.f32 %v719, %v720
        %v722 = vrot.slane %v721, 1
        %v723 = vadd.f32 %v721, %v722
        %s724 = vtos %v723
        %s725 = smul.f32 %s406, %s724
        %s726 = smul.f32 %s725, %s713
        %v727 = vmul.f32 %v438, %v711
        %v728 = vstv %s726
        %v729 = vmul.f32 %v728, %v708
        %v730 = vadd.f32 %v727, %v729
        %s731 = smul.f32 %s407, %s712
        %s732 = smul.f32 %s408, %s726
        %s733 = smul.f32 %s732, %s724
        %s734 = sadd.f32 %s731, %s733
        %s735 = smul.f32 %s726, %s726
        %s736 = smul.f32 %s735, %s710
        %s737 = sadd.f32 %s734, %s736
        %v738 = vstv %s737
        %v739 = vrsqrt.pop %v738
        %s740 = vtos %v739
        %s741 = smul.f32 %s404, %s724
        %s742 = smul.f32 %s726, %s710
        %s743 = sadd.f32 %s741, %s742
        %s744 = smul.f32 %s743, %s740
        %745 = vst [vmem:[#allocation11 + $0x6] sm:$0x1] %v730
        %v746 = vstv %s740
        %v747 = vmul.f32 %v730, %v746
        %748 = vst [vmem:[#allocation12 + $0x6] sm:$0x1] %v747
        %s749 = scalar_lea.smem [#allocation2], 6
        %750 = sst [smem:[%s749]] %s737
        %s751 = scalar_lea.smem [#allocation3], 6
        %752 = sst [smem:[%s751]] %s740
        %s753 = smul.f32 %s744, %s740
        %v754 = vstv %s753
        %v755 = vmul.f32 %v754, %v730
        %v756 = vsub.f32 %v708, %v755
        %s757 = smul.f32 %s744, %s744
        %s758 = ssub.f32 %s710, %s757
        %v759 = vld [vmem:[#allocation11 + $0x7] sm:$0x1]
        %s760 = sld [smem:[#allocation2 + $0x7]]
        %s761 = sld [smem:[#allocation3 + $0x7]]
        %v762 = vmul.f32 %v756, %v759
        %v763 = vsel %vm411, %v762, 0.0
        %764 = vadd.xlane.f32.xlu0 %v763
        %v765 = vpop.xlane.xlu0 %764
        %v766 = vrot.slane %v765, 4
        %v767 = vadd.f32 %v765, %v766
        %v768 = vrot.slane %v767, 2
        %v769 = vadd.f32 %v767, %v768
        %v770 = vrot.slane %v769, 1
        %v771 = vadd.f32 %v769, %v770
        %s772 = vtos %v771
        %s773 = smul.f32 %s406, %s772
        %s774 = smul.f32 %s773, %s761
        %v775 = vmul.f32 %v438, %v759
        %v776 = vstv %s774
        %v777 = vmul.f32 %v776, %v756
        %v778 = vadd.f32 %v775, %v777
        %s779 = smul.f32 %s407, %s760
        %s780 = smul.f32 %s408, %s774
        %s781 = smul.f32 %s780, %s772
        %s782 = sadd.f32 %s779, %s781
        %s783 = smul.f32 %s774, %s774
        %s784 = smul.f32 %s783, %s758
        %s785 = sadd.f32 %s782, %s784
        %v786 = vstv %s785
        %v787 = vrsqrt.pop %v786
        %s788 = vtos %v787
        %789 = vst [vmem:[#allocation11 + $0x7] sm:$0x1] %v778
        %v790 = vstv %s788
        %v791 = vmul.f32 %v778, %v790
        %792 = vst [vmem:[#allocation12 + $0x7] sm:$0x1] %v791
        %s793 = scalar_lea.smem [#allocation2], 7
        %794 = sst [smem:[%s793]] %s785
        %s795 = scalar_lea.smem [#allocation3], 7
        %796 = sst [smem:[%s795]] %s788
        %v797 = vld [vmem:[#allocation11] sm:$0xff]
        %v798 = vmul.f32 %v797, %v797
        %799 = vadd.xlane.f32.xlu0 %v798
        %v800 = vpop.xlane.xlu0 %799
        %v801 = vrsqrt.pop %v800
        %v802 = vmul.f32 %v800, %v801
        %vm803 = vcmp.eq.f32.partialorder %v800, inf
        %v804 = vsel %vm803, %v800, %v802
        %vm805 = vcmp.eq.f32.partialorder %v800, 0.0
        %v806 = vand.u32 %v800, 2147483648
        %v807 = vsel %vm805, %v806, %v804
        %vm808 = vcmask 7168
        %809 = vst.msk [vmem:[%s324] sm:$0xff] %vm808, %v807
        %v810 = vld [vmem:[#allocation12] sm:$0xff]
        %v812 = vlaneseq
        %v813 = vshrl.u32 %v812, 7
        %v814 = vsub.s32 0, %v813
        %v815 = vrot.slane %v409, %v814
        %v817 = vmul.f32 %v815, %v810
        %818 = vadd.xlane.f32.xlu0 %v817
        %v819 = vpop.xlane.xlu0 %818
        %820 = vst.msk [vmem:[%s320] sm:$0xff] %vm808, %v819
        %p821 = scmp.lt.s32.totalorder %s26, 3
        %s822 = scalar_select %p821, %s26, 3
        %s823 = smul.addr %s822, 8
        %s824 = scalar_lea.vmem %s4, %s823
        %p825 = scmp.lt.s32.totalorder %s26, 3
        %s826 = scalar_select %p825, %s26, 3
        %s827 = smul.addr %s826, 8
        %s828 = scalar_lea.vmem %s7, %s827
        // Predicated region
        $region53: #{tpu_custom_call.1} parent=35 // pred_check
          %p829 = pneg %p133
        $region54: #{tpu_custom_call.1} parent=35 // pred_check_branch
          %831 = sbr.rel (%p829) target = $region56
        $region55: #{tpu_custom_call.1} parent=35 // pred_region
          _
        $region56: #{tpu_custom_call.1} parent=35 // pred_fallthru
          _
        // Predicated region
        $region57: #{tpu_custom_call.1} parent=35 // pred_check
          %p832 = pneg %p154
        $region58: #{tpu_custom_call.1} parent=35 // pred_check_branch
          %834 = sbr.rel (%p832) target = $region60
        $region59: #{tpu_custom_call.1} parent=35 // pred_region
          %s836 = ssub.s32 128, 128
          %837 = vsyncadd [#allocation6], %s836
          %s839 = sshll.u32 [#allocation11], 4
          %s840 = int_to_ptr.vmem [resolvable:$true] %s839
          %842 = dma.vmem_to_hbm [thread:$0]  %s840, 128, %s5, [#allocation6]
        $region60: #{tpu_custom_call.1} parent=35 // pred_fallthru
          _
        // Predicated region
        $region61: #{tpu_custom_call.1} parent=35 // pred_check
          %p843 = pneg %p175
        $region62: #{tpu_custom_call.1} parent=35 // pred_check_branch
          %845 = sbr.rel (%p843) target = $region64
        $region63: #{tpu_custom_call.1} parent=35 // pred_region
          %s847 = ssub.s32 128, 128
          %848 = vsyncadd [#allocation13], %s847
          %s850 = sshll.u32 [#allocation12], 4
          %s851 = int_to_ptr.vmem [resolvable:$true] %s850
          %853 = dma.vmem_to_hbm [thread:$0]  %s851, 128, %s6, [#allocation13]
        $region64: #{tpu_custom_call.1} parent=35 // pred_fallthru
          _
        // Predicated region
        $region65: #{tpu_custom_call.1} parent=35 // pred_check
          %p854 = pneg %p201
        $region66: #{tpu_custom_call.1} parent=35 // pred_check_branch
          %856 = sbr.rel (%p854) target = $region68
        $region67: #{tpu_custom_call.1} parent=35 // pred_region
          _
        $region68: #{tpu_custom_call.1} parent=35 // pred_fallthru
          _
        // Predicated region
        $region69: #{tpu_custom_call.1} parent=35 // pred_check
          %p857 = pneg %p154
        $region70: #{tpu_custom_call.1} parent=35 // pred_check_branch
          %859 = sbr.rel (%p857) target = $region72
        $region71: #{tpu_custom_call.1} parent=35 // pred_region
          %860 = dma.done [#allocation6], 128
        $region72: #{tpu_custom_call.1} parent=35 // pred_fallthru
          _
        // Predicated region
        $region73: #{tpu_custom_call.1} parent=35 // pred_check
          %p861 = pneg %p175
        $region74: #{tpu_custom_call.1} parent=35 // pred_check_branch
          %863 = sbr.rel (%p861) target = $region76
        $region75: #{tpu_custom_call.1} parent=35 // pred_region
          %864 = dma.done [#allocation13], 128
        $region76: #{tpu_custom_call.1} parent=35 // pred_fallthru
          _
      $region36: #{tpu_custom_call.1} parent=5 // pred_fallthru
        _
      %p865 = scmp.le.s32.totalorder 2, %s21
      // Predicated region
      $region77: #{tpu_custom_call.1} parent=5 // pred_check
        %p866 = pneg %p865
      $region78: #{tpu_custom_call.1} parent=5 // pred_check_branch
        %868 = sbr.rel (%p866) target = $region80
      $region79: #{tpu_custom_call.1} parent=5 // pred_region
        %s869 = ssub.s32 %s21, 2
        // Predicated region
        $region81: #{tpu_custom_call.1} parent=79 // pred_check
          %p870 = pneg %p139
        $region82: #{tpu_custom_call.1} parent=79 // pred_check_branch
          %872 = sbr.rel (%p870) target = $region84
        $region83: #{tpu_custom_call.1} parent=79 // pred_region
          %p873 = scmp.lt.s32.totalorder %s27, 3
          %s874 = scalar_select %p873, %s27, 3
          %s875 = smul.addr %s874, 8
          %s876 = scalar_lea.vmem %s4, %s875
        $region84: #{tpu_custom_call.1} parent=79 // pred_fallthru
          _
        // Predicated region
        $region85: #{tpu_custom_call.1} parent=79 // pred_check
          %p877 = pneg %p207
        $region86: #{tpu_custom_call.1} parent=79 // pred_check_branch
          %879 = sbr.rel (%p877) target = $region88
        $region87: #{tpu_custom_call.1} parent=79 // pred_region
          %p880 = scmp.lt.s32.totalorder %s27, 3
          %s881 = scalar_select %p880, %s27, 3
          %s882 = smul.addr %s881, 8
          %s883 = scalar_lea.vmem %s7, %s882
        $region88: #{tpu_custom_call.1} parent=79 // pred_fallthru
          _
      $region80: #{tpu_custom_call.1} parent=5 // pred_fallthru
        _
    $region6: #{tpu_custom_call.1} parent=1 // loop_footer
      %s25 = sadd.s32 1, %s21
    $region7: #{tpu_custom_call.1} parent=1 // loop_footer_branch
      %20 = sbr.rel target = $region3
    $region8: #{tpu_custom_call.1} parent=1 // loop_exit
      _
    %884 = vsyncpa [#allocation5], 1
    %s885 = scalar_lea.sflag [#allocation5], 1
    %886 = vsyncpa %s885, 1
    %887 = vsyncpa [#allocation6], 1
    %s888 = scalar_lea.sflag [#allocation6], 1
    %889 = vsyncpa %s888, 1
    %890 = vsyncpa [#allocation13], 1
    %891 = vsyncpa [#allocation7], 1
    %s892 = scalar_lea.sflag [#allocation7], 1
    %893 = vsyncpa %s892, 1
    %894 = vsyncpa [#allocation10], 1

</llo_original>
